<compile_context>
chip_gen: v7x
topology: tpu7x:2x2x1
jax: 0.10.0
libtpu: 0.0.40
codegen_flags: <defaults>
</compile_context>

<pallas_src>
import functools

import jax
import jax.numpy as jnp
import numpy as np
from jax.experimental import pallas as pl
from jax.experimental.pallas import tpu as pltpu


def _round_up(v, m):
    return ((v + m - 1) // m) * m


# ---------------- fused Bottleneck kernel ------------------------------------

def _make_bottleneck_kernel(H, W, Ch, Cout, bh, pad_top, pad_bot, use_add,
                            wide, cdt):
    P = H * W                 # rows of the dense flat image
    L = bh * W                # rows per band
    nb = H // bh              # number of row bands
    SLAB = L + 2 * W + 2      # padded-y rows one conv2 band depends on

    def kernel(x_ref, w1_ref, s1_ref, b1_ref, w2_ref, s2_ref, b2_ref,
               o_ref, y_ref):
        # y_ref: (pad_top + P + pad_bot, Ch) scratch holding the padded conv1
        # output; rows [pad_top, pad_top+P) are real, the rest is the zero
        # top/bottom halo consumed by the 3x3 conv.
        y_ref[pl.ds(0, pad_top), :] = jnp.zeros((pad_top, Ch), cdt)
        y_ref[pl.ds(pad_top + P, pad_bot), :] = jnp.zeros((pad_bot, Ch), cdt)

        # ---- stage 1: 1x1 conv + folded BN + SiLU, one row band at a time ----
        def conv1_band(b, carry):
            r0 = pl.multiple_of(b * L, 8) if L % 8 == 0 else b * L
            xb = x_ref[pl.ds(r0, L), :].astype(cdt)
            yb = jnp.dot(xb, w1_ref[...], preferred_element_type=jnp.float32)
            yb = yb * s1_ref[...] + b1_ref[...]
            yb = yb * jax.nn.sigmoid(yb)                        # SiLU
            y_ref[pl.ds(pad_top + r0, L), :] = yb.astype(cdt)
            return carry

        jax.lax.fori_loop(0, nb, conv1_band, 0)

        # Left/right zero padding of the 3x3 conv is realized by masking the
        # edge-column contributions (pattern repeats every W rows, so it is the
        # same for every band).
        col = jax.lax.broadcasted_iota(jnp.int32, (L, 1), 0) % W
        mask_l = (col >= 1).astype(jnp.float32)        # taps with kdx == 0
        mask_r = (col <= W - 2).astype(jnp.float32)    # taps with kdx == 2

        # ---- stage 2: 3x3 conv + folded BN + SiLU (+ residual), banded -------
        def conv2_band(b, carry):
            r0 = pl.multiple_of(b * L, 8) if L % 8 == 0 else b * L
            acc = jnp.zeros((L, Cout), jnp.float32)
            if wide:
                # One wide matmul against (Ch, 9*Cout), then 9 shifted, masked
                # column-slice accumulations (VPU work).
                slab = y_ref[pl.ds(pad_top + r0 - (W + 1), SLAB), :]
                u = jnp.dot(slab, w2_ref[...],
                            preferred_element_type=jnp.float32)
                for t in range(9):
                    dy, dx = t // 3, t % 3
                    off = dy * W + dx                    # static offsets
                    c = u[off:off + L, t * Cout:(t + 1) * Cout]
                    if dx == 0:
                        c = c * mask_l
                    elif dx == 2:
                        c = c * mask_r
                    acc = acc + c
            else:
                # Lane-dense Cout: nine per-tap (L, Ch) @ (Ch, Cout) matmuls on
                # shifted row slices of the padded y scratch.
                for t in range(9):
                    dy, dx = t // 3, t % 3
                    src = pad_top + r0 + (dy - 1) * W + (dx - 1)
                    yt = y_ref[pl.ds(src, L), :]
                    c = jnp.dot(yt, w2_ref[t],
                                preferred_element_type=jnp.float32)
                    if dx == 0:
                        c = c * mask_l
                    elif dx == 2:
                        c = c * mask_r
                    acc = acc + c

            z = acc * s2_ref[...] + b2_ref[...]
            z = z * jax.nn.sigmoid(z)                           # SiLU
            if use_add:                                         # residual
                z = z + x_ref[pl.ds(r0, L), :].astype(jnp.float32)
            o_ref[pl.ds(r0, L), :] = z.astype(o_ref.dtype)
            return carry

        jax.lax.fori_loop(0, nb, conv2_band, 0)

    return kernel


def bottleneck(x_nhwc, params, *, shortcut=True, compute_dtype=None,
               band_rows=None):
    """Pallas forward of Bottleneck (depthwise=False, act='silu', eval BN).

    x_nhwc: (N, H, W, Cin) activations in NHWC (natural TPU layout).
    Returns (N, H, W, Cout).
    """
    N, H, W, Cin = x_nhwc.shape
    Ch = params["w1"].shape[1]
    Cout = params["w2"].shape[2]
    use_add = bool(shortcut and Cin == Cout)
    cdt = jnp.dtype(compute_dtype) if compute_dtype is not None else x_nhwc.dtype

    if band_rows is None:       # largest divisor of H keeping a band <= 128 rows
        cands = [d for d in range(1, H + 1) if H % d == 0 and d * W <= 128]
        band_rows = max(cands) if cands else 1
    assert H % band_rows == 0, (H, band_rows)

    pad_top = _round_up(W + 1, 8)      # zero halo rows above/below the image
    pad_bot = _round_up(W + 1, 8)      # inside the y scratch
    P = H * W

    wide = Cout < 128                  # small Cout -> one (Ch, 9*Cout) matmul

    w1 = params["w1"].astype(cdt)
    if wide:
        w2 = jnp.transpose(params["w2"], (1, 0, 2)).reshape(Ch, 9 * Cout)
        w2 = w2.astype(cdt)
        w2_spec = pl.BlockSpec((Ch, 9 * Cout), lambda n: (0, 0))
    else:
        w2 = params["w2"].astype(cdt)
        w2_spec = pl.BlockSpec((9, Ch, Cout), lambda n: (0, 0, 0))

    s1 = params["scale1"].reshape(1, Ch).astype(jnp.float32)
    b1 = params["bias1"].reshape(1, Ch).astype(jnp.float32)
    s2 = params["scale2"].reshape(1, Cout).astype(jnp.float32)
    b2 = params["bias2"].reshape(1, Cout).astype(jnp.float32)

    xf = x_nhwc.reshape(N, P, Cin)     # free reshape, no data movement

    out_flat = pl.pallas_call(
        _make_bottleneck_kernel(H, W, Ch, Cout, band_rows, pad_top, pad_bot,
                                use_add, wide, cdt),
        out_shape=jax.ShapeDtypeStruct((N, P, Cout), x_nhwc.dtype),
        grid_spec=pltpu.PrefetchScalarGridSpec(
            num_scalar_prefetch=0,
            grid=(N,),
            in_specs=[
                pl.BlockSpec((None, P, Cin), lambda n: (n, 0, 0)),   # x (flat)
                pl.BlockSpec((Cin, Ch), lambda n: (0, 0)),           # W1
                pl.BlockSpec((1, Ch), lambda n: (0, 0)),             # BN1 scale
                pl.BlockSpec((1, Ch), lambda n: (0, 0)),             # BN1 bias
                w2_spec,                                             # W2
                pl.BlockSpec((1, Cout), lambda n: (0, 0)),           # BN2 scale
                pl.BlockSpec((1, Cout), lambda n: (0, 0)),           # BN2 bias
            ],
            out_specs=pl.BlockSpec((None, P, Cout), lambda n: (n, 0, 0)),
            scratch_shapes=[
                pltpu.VMEM((pad_top + P + pad_bot, Ch), cdt),        # padded y
            ],
        ),
        compiler_params=pltpu.CompilerParams(
            dimension_semantics=("parallel",),
            vmem_limit_bytes=32 * 1024 * 1024),
    )(xf, w1, s1, b1, w2, s2, b2)

    return out_flat.reshape(N, H, W, Cout)


# ---------------- pure-JAX reference for correctness -------------------------

def bottleneck_ref(x_nhwc, params, *, shortcut=True):
    N, H, W, Cin = x_nhwc.shape
    Cout = params["w2"].shape[2]
    use_add = bool(shortcut and Cin == Cout)

    y = jnp.einsum("nhwc,cd->nhwd", x_nhwc, params["w1"])
    y = y * params["scale1"] + params["bias1"]
    y = y * jax.nn.sigmoid(y)

    yp = jnp.pad(y, ((0, 0), (1, 1), (1, 1), (0, 0)))
    z = jnp.zeros((N, H, W, Cout), jnp.float32)
    for t in range(9):                                   # 3x3, stride 1, pad 1
        dy, dx = t // 3, t % 3
        z = z + jnp.einsum("nhwc,cd->nhwd",
                           yp[:, dy:dy + H, dx:dx + W, :], params["w2"][t])
    z = z * params["scale2"] + params["bias2"]
    z = z * jax.nn.sigmoid(z)
    if use_add:
        z = z + x_nhwc
    return z


# ---------------- deterministic parameter init --------------------------------

def fold_bn(gamma, beta, mean, var, eps=1e-5):
    scale = gamma / jnp.sqrt(var + eps)
    bias = beta - mean * scale
    return scale, bias


def init_params(key, in_channels, out_channels, expansion=0.5):
    hidden = int(out_channels * expansion)
    ks = jax.random.split(key, 10)
    # conv1: 1x1 conv (Cin -> hidden), bias=False; BN folded (eval mode)
    w1 = 0.2 * jax.random.normal(ks[0], (in_channels, hidden), jnp.float32)
    g1 = 1.0 + 0.1 * jax.random.normal(ks[1], (hidden,), jnp.float32)
    b1 = 0.1 * jax.random.normal(ks[2], (hidden,), jnp.float32)
    m1 = 0.05 * jax.random.normal(ks[3], (hidden,), jnp.float32)
    v1 = 0.5 + jnp.abs(jax.random.normal(ks[4], (hidden,), jnp.float32))
    scale1, bias1 = fold_bn(g1, b1, m1, v1)
    # conv2: 3x3 conv (hidden -> Cout), bias=False; weights stored per-tap as
    # (9, hidden, Cout) with tap index t = ky*3 + kx; BN folded.
    w2 = 0.2 * jax.random.normal(ks[5], (9, hidden, out_channels), jnp.float32)
    g2 = 1.0 + 0.1 * jax.random.normal(ks[6], (out_channels,), jnp.float32)
    b2 = 0.1 * jax.random.normal(ks[7], (out_channels,), jnp.float32)
    m2 = 0.05 * jax.random.normal(ks[8], (out_channels,), jnp.float32)
    v2 = 0.5 + jnp.abs(jax.random.normal(ks[9], (out_channels,), jnp.float32))
    scale2, bias2 = fold_bn(g2, b2, m2, v2)
    return dict(w1=w1, scale1=scale1, bias1=bias1,
                w2=w2, scale2=scale2, bias2=bias2)


if __name__ == "__main__":
    root = jax.random.PRNGKey(0)
    keys = jax.random.split(root, 6)

    def run_case(kx, kp, *, N, C, H, W, compute_dtype=None, band_rows=None,
                 rtol, atol):
        x = jax.random.normal(kx, (N, H, W, C), jnp.float32)
        params = init_params(kp, C, C)          # in == out -> residual active
        fn = jax.jit(functools.partial(bottleneck, shortcut=True,
                                       compute_dtype=compute_dtype,
                                       band_rows=band_rows))
        out = jax.block_until_ready(fn(x, params))
        ref = bottleneck_ref(x, params)
        assert out.shape == (N, H, W, C), out.shape
        np.testing.assert_allclose(np.asarray(out), np.asarray(ref),
                                   rtol=rtol, atol=atol)

    # 1) small channels -> wide-matmul conv2 path, 2 row bands, f32 matmuls
    run_case(keys[0], keys[1], N=2, C=8, H=16, W=16, rtol=1e-3, atol=2e-3)
    # 2) lane-dense channels (YOLO-like C=128) -> per-tap matmul path, 2 bands
    run_case(keys[2], keys[3], N=1, C=128, H=8, W=8, band_rows=4,
             rtol=1e-3, atol=2e-3)
    # 3) bf16 matmul operands (v6e/v7x MXU) with f32 accumulation + epilogue
    run_case(keys[4], keys[5], N=2, C=8, H=16, W=16,
             compute_dtype=jnp.bfloat16, rtol=5e-2, atol=5e-2)

    print("KERNEL_OK")
</pallas_src>

<mosaic_0001>
module attributes {stable_mosaic.version = 11 : i64} {
  func.func @kernel(%arg0: i32, %arg1: memref<1x256x8xf32, #tpu.memory_space<vmem>>, %arg2: memref<8x4xf32, #tpu.memory_space<vmem>>, %arg3: memref<1x4xf32, #tpu.memory_space<vmem>>, %arg4: memref<1x4xf32, #tpu.memory_space<vmem>>, %arg5: memref<4x72xf32, #tpu.memory_space<vmem>>, %arg6: memref<1x8xf32, #tpu.memory_space<vmem>>, %arg7: memref<1x8xf32, #tpu.memory_space<vmem>>, %arg8: memref<1x256x8xf32, #tpu.memory_space<vmem>>, %arg9: memref<304x4xf32, #tpu.memory_space<vmem>>) attributes {dimension_semantics = [#tpu.dimension_semantics<parallel>], iteration_bounds = array<i64: 2>, scalar_prefetch = 0 : i64, scratch_operands = 1 : i64, tpu.core_type = #tpu.core_type<tc>, window_params = [{transform_indices = @transform_0, window_bounds = array<i64: 1, 256, 8>}, {pipeline_mode = #tpu.pipeline_mode<synchronous>, transform_indices = @transform_1, window_bounds = array<i64: 8, 4>}, {pipeline_mode = #tpu.pipeline_mode<synchronous>, transform_indices = @transform_2, window_bounds = array<i64: 1, 4>}, {pipeline_mode = #tpu.pipeline_mode<synchronous>, transform_indices = @transform_3, window_bounds = array<i64: 1, 4>}, {pipeline_mode = #tpu.pipeline_mode<synchronous>, transform_indices = @transform_4, window_bounds = array<i64: 4, 72>}, {pipeline_mode = #tpu.pipeline_mode<synchronous>, transform_indices = @transform_5, window_bounds = array<i64: 1, 8>}, {pipeline_mode = #tpu.pipeline_mode<synchronous>, transform_indices = @transform_6, window_bounds = array<i64: 1, 8>}, {transform_indices = @transform_7, window_bounds = array<i64: 1, 256, 8>}]} {
    %cst = arith.constant 0.000000e+00 : f32
    %0 = vector.broadcast %cst : f32 to vector<24x4xf32>
    %c0 = arith.constant 0 : index
    %c0_0 = arith.constant 0 : index
    %1 = vector.load %arg9[%c0, %c0_0] : memref<304x4xf32, #tpu.memory_space<vmem>>, vector<24x4xf32>
    tpu.vector_store %arg9[%c0, %c0_0], %0 {strides = array<i32>} : memref<304x4xf32, #tpu.memory_space<vmem>>, vector<24x4xf32>,
    %cst_1 = arith.constant 0.000000e+00 : f32
    %2 = vector.broadcast %cst_1 : f32 to vector<24x4xf32>
    %c280 = arith.constant 280 : index
    %c0_2 = arith.constant 0 : index
    %3 = vector.load %arg9[%c280, %c0_2] : memref<304x4xf32, #tpu.memory_space<vmem>>, vector<24x4xf32>
    tpu.vector_store %arg9[%c280, %c0_2], %2 {strides = array<i32>} : memref<304x4xf32, #tpu.memory_space<vmem>>, vector<24x4xf32>,
    %c0_i32 = arith.constant 0 : i32
    %c2_i32 = arith.constant 2 : i32
    %4 = arith.addi %c0_i32, %c2_i32 : i32
    %c1_i32 = arith.constant 1 : i32
    scf.for %arg10 = %c0_i32 to %4 step %c1_i32  : i32 {
      %c128_i32 = arith.constant 128 : i32
      %31 = arith.muli %arg10, %c128_i32 : i32
      %32 = tpu.assume_multiple %31, 8 : i32
      %c0_14 = arith.constant 0 : index
      %33 = arith.index_cast %32 : i32 to index
      %c0_15 = arith.constant 0 : index
      %34 = vector.load %arg1[%c0_14, %33, %c0_15] : memref<1x256x8xf32, #tpu.memory_space<vmem>>, vector<1x128x8xf32>
      %35 = vector.shape_cast %34 : vector<1x128x8xf32> to vector<128x8xf32>
      %c0_16 = arith.constant 0 : index
      %c0_17 = arith.constant 0 : index
      %36 = vector.load %arg2[%c0_16, %c0_17] : memref<8x4xf32, #tpu.memory_space<vmem>>, vector<8x4xf32>
      %cst_18 = arith.constant dense<0.000000e+00> : vector<128x4xf32>
      %37 = tpu.matmul %35, %36, %cst_18 {dimension_numbers = #tpu.dot_dimension_numbers<[1], [0], [0], [1], [0, 0, 1, 1], [], []>} : vector<128x8xf32>, vector<8x4xf32>, vector<128x4xf32> -> vector<128x4xf32>
      %c0_19 = arith.constant 0 : index
      %c0_20 = arith.constant 0 : index
      %38 = vector.load %arg3[%c0_19, %c0_20] : memref<1x4xf32, #tpu.memory_space<vmem>>, vector<1x4xf32>
      %39 = vector.broadcast %38 : vector<1x4xf32> to vector<128x4xf32>
      %40 = arith.mulf %37, %39 : vector<128x4xf32>
      %c0_21 = arith.constant 0 : index
      %c0_22 = arith.constant 0 : index
      %41 = vector.load %arg4[%c0_21, %c0_22] : memref<1x4xf32, #tpu.memory_space<vmem>>, vector<1x4xf32>
      %42 = vector.broadcast %41 : vector<1x4xf32> to vector<128x4xf32>
      %43 = arith.addf %40, %42 : vector<128x4xf32>
      %44 = arith.negf %43 : vector<128x4xf32>
      %45 = math.exp %44 : vector<128x4xf32>
      %cst_23 = arith.constant 1.000000e+00 : f32
      %46 = vector.broadcast %cst_23 : f32 to vector<128x4xf32>
      %47 = arith.addf %46, %45 : vector<128x4xf32>
      %48 = arith.divf %46, %47 : vector<128x4xf32>
      %49 = arith.mulf %43, %48 : vector<128x4xf32>
      %c24_i32 = arith.constant 24 : i32
      %50 = arith.addi %c24_i32, %32 : i32
      %51 = arith.index_cast %50 : i32 to index
      %c0_24 = arith.constant 0 : index
      %52 = vector.load %arg9[%51, %c0_24] : memref<304x4xf32, #tpu.memory_space<vmem>>, vector<128x4xf32>
      tpu.vector_store %arg9[%51, %c0_24], %49 {strides = array<i32>} : memref<304x4xf32, #tpu.memory_space<vmem>>, vector<128x4xf32>,
    }
    %c2_i32_3 = arith.constant 2 : i32
    %5 = tpu.iota {dimensions = array<i32: 0>} : vector<128x1xi32>
    %c16_i32 = arith.constant 16 : i32
    %c0_i32_4 = arith.constant 0 : i32
    %6 = arith.cmpi eq, %c16_i32, %c0_i32_4 : i32
    %c1_i32_5 = arith.constant 1 : i32
    %7 = arith.select %6, %c1_i32_5, %c16_i32 : i32
    %8 = vector.broadcast %7 : i32 to vector<128x1xi32>
    %9 = arith.remsi %5, %8 : vector<128x1xi32>
    %c0_i32_6 = arith.constant 0 : i32
    %10 = vector.broadcast %c0_i32_6 : i32 to vector<128x1xi32>
    %11 = arith.cmpi ne, %9, %10 : vector<128x1xi32>
    %c0_i32_7 = arith.constant 0 : i32
    %12 = vector.broadcast %c0_i32_7 : i32 to vector<128x1xi32>
    %13 = arith.cmpi slt, %9, %12 : vector<128x1xi32>
    %c0_i32_8 = arith.constant 0 : i32
    %14 = arith.cmpi slt, %7, %c0_i32_8 : i32
    %15 = vector.broadcast %14 : i1 to vector<128x1xi1>
    %16 = vector.broadcast %15 : vector<128x1xi1> to vector<128x1xi1>
    %17 = arith.xori %13, %16 : vector<128x1xi1>
    %18 = arith.andi %17, %11 : vector<128x1xi1>
    %19 = vector.broadcast %7 : i32 to vector<128x1xi32>
    %20 = arith.addi %9, %19 : vector<128x1xi32>
    %21 = arith.select %18, %20, %9 : vector<128x1xi1>, vector<128x1xi32>
    %c1_i32_9 = arith.constant 1 : i32
    %22 = vector.broadcast %c1_i32_9 : i32 to vector<128x1xi32>
    %23 = arith.cmpi sge, %21, %22 : vector<128x1xi32>
    %24 = arith.extui %23 : vector<128x1xi1> to vector<128x1xi32>
    %25 = arith.sitofp %24 : vector<128x1xi32> to vector<128x1xf32>
    %c14_i32 = arith.constant 14 : i32
    %26 = vector.broadcast %c14_i32 : i32 to vector<128x1xi32>
    %27 = arith.cmpi sle, %21, %26 : vector<128x1xi32>
    %28 = arith.extui %27 : vector<128x1xi1> to vector<128x1xi32>
    %29 = arith.sitofp %28 : vector<128x1xi32> to vector<128x1xf32>
    %c0_i32_10 = arith.constant 0 : i32
    %c2_i32_11 = arith.constant 2 : i32
    %30 = arith.addi %c0_i32_10, %c2_i32_11 : i32
    %c1_i32_12 = arith.constant 1 : i32
    scf.for %arg10 = %c0_i32_10 to %30 step %c1_i32_12  : i32 {
      %c128_i32 = arith.constant 128 : i32
      %31 = arith.muli %arg10, %c128_i32 : i32
      %32 = tpu.assume_multiple %31, 8 : i32
      %cst_14 = arith.constant 0.000000e+00 : f32
      %33 = vector.broadcast %cst_14 : f32 to vector<128x8xf32>
      %c24_i32 = arith.constant 24 : i32
      %34 = arith.addi %c24_i32, %32 : i32
      %c17_i32 = arith.constant 17 : i32
      %35 = arith.subi %34, %c17_i32 : i32
      %36 = arith.index_cast %35 : i32 to index
      %c0_15 = arith.constant 0 : index
      %37 = vector.load %arg9[%36, %c0_15] : memref<304x4xf32, #tpu.memory_space<vmem>>, vector<162x4xf32>
      %c0_16 = arith.constant 0 : index
      %c0_17 = arith.constant 0 : index
      %38 = vector.load %arg5[%c0_16, %c0_17] : memref<4x72xf32, #tpu.memory_space<vmem>>, vector<4x72xf32>
      %cst_18 = arith.constant dense<0.000000e+00> : vector<162x72xf32>
      %39 = tpu.matmul %37, %38, %cst_18 {dimension_numbers = #tpu.dot_dimension_numbers<[1], [0], [0], [1], [0, 0, 1, 1], [], []>} : vector<162x4xf32>, vector<4x72xf32>, vector<162x72xf32> -> vector<162x72xf32>
      %40 = vector.extract_strided_slice %39 {offsets = [0, 0], sizes = [128, 8], strides = [1, 1]} : vector<162x72xf32> to vector<128x8xf32>
      %41 = vector.broadcast %25 : vector<128x1xf32> to vector<128x8xf32>
      %42 = arith.mulf %40, %41 : vector<128x8xf32>
      %43 = arith.addf %33, %42 : vector<128x8xf32>
      %44 = vector.extract_strided_slice %39 {offsets = [1, 8], sizes = [128, 8], strides = [1, 1]} : vector<162x72xf32> to vector<128x8xf32>
      %45 = arith.addf %43, %44 : vector<128x8xf32>
      %46 = vector.extract_strided_slice %39 {offsets = [2, 16], sizes = [128, 8], strides = [1, 1]} : vector<162x72xf32> to vector<128x8xf32>
      %47 = vector.broadcast %29 : vector<128x1xf32> to vector<128x8xf32>
      %48 = arith.mulf %46, %47 : vector<128x8xf32>
      %49 = arith.addf %45, %48 : vector<128x8xf32>
      %50 = vector.extract_strided_slice %39 {offsets = [16, 24], sizes = [128, 8], strides = [1, 1]} : vector<162x72xf32> to vector<128x8xf32>
      %51 = vector.broadcast %25 : vector<128x1xf32> to vector<128x8xf32>
      %52 = arith.mulf %50, %51 : vector<128x8xf32>
      %53 = arith.addf %49, %52 : vector<128x8xf32>
      %54 = vector.extract_strided_slice %39 {offsets = [17, 32], sizes = [128, 8], strides = [1, 1]} : vector<162x72xf32> to vector<128x8xf32>
      %55 = arith.addf %53, %54 : vector<128x8xf32>
      %56 = vector.extract_strided_slice %39 {offsets = [18, 40], sizes = [128, 8], strides = [1, 1]} : vector<162x72xf32> to vector<128x8xf32>
      %57 = vector.broadcast %29 : vector<128x1xf32> to vector<128x8xf32>
      %58 = arith.mulf %56, %57 : vector<128x8xf32>
      %59 = arith.addf %55, %58 : vector<128x8xf32>
      %60 = vector.extract_strided_slice %39 {offsets = [32, 48], sizes = [128, 8], strides = [1, 1]} : vector<162x72xf32> to vector<128x8xf32>
      %61 = vector.broadcast %25 : vector<128x1xf32> to vector<128x8xf32>
      %62 = arith.mulf %60, %61 : vector<128x8xf32>
      %63 = arith.addf %59, %62 : vector<128x8xf32>
      %64 = vector.extract_strided_slice %39 {offsets = [33, 56], sizes = [128, 8], strides = [1, 1]} : vector<162x72xf32> to vector<128x8xf32>
      %65 = arith.addf %63, %64 : vector<128x8xf32>
      %66 = vector.extract_strided_slice %39 {offsets = [34, 64], sizes = [128, 8], strides = [1, 1]} : vector<162x72xf32> to vector<128x8xf32>
      %67 = vector.broadcast %29 : vector<128x1xf32> to vector<128x8xf32>
      %68 = arith.mulf %66, %67 : vector<128x8xf32>
      %69 = arith.addf %65, %68 : vector<128x8xf32>
      %c0_19 = arith.constant 0 : index
      %c0_20 = arith.constant 0 : index
      %70 = vector.load %arg6[%c0_19, %c0_20] : memref<1x8xf32, #tpu.memory_space<vmem>>, vector<1x8xf32>
      %71 = vector.broadcast %70 : vector<1x8xf32> to vector<128x8xf32>
      %72 = arith.mulf %69, %71 : vector<128x8xf32>
      %c0_21 = arith.constant 0 : index
      %c0_22 = arith.constant 0 : index
      %73 = vector.load %arg7[%c0_21, %c0_22] : memref<1x8xf32, #tpu.memory_space<vmem>>, vector<1x8xf32>
      %74 = vector.broadcast %73 : vector<1x8xf32> to vector<128x8xf32>
      %75 = arith.addf %72, %74 : vector<128x8xf32>
      %76 = arith.negf %75 : vector<128x8xf32>
      %77 = math.exp %76 : vector<128x8xf32>
      %cst_23 = arith.constant 1.000000e+00 : f32
      %78 = vector.broadcast %cst_23 : f32 to vector<128x8xf32>
      %79 = arith.addf %78, %77 : vector<128x8xf32>
      %80 = arith.divf %78, %79 : vector<128x8xf32>
      %81 = arith.mulf %75, %80 : vector<128x8xf32>
      %c0_24 = arith.constant 0 : index
      %82 = arith.index_cast %32 : i32 to index
      %c0_25 = arith.constant 0 : index
      %83 = vector.load %arg1[%c0_24, %82, %c0_25] : memref<1x256x8xf32, #tpu.memory_space<vmem>>, vector<1x128x8xf32>
      %84 = vector.shape_cast %83 : vector<1x128x8xf32> to vector<128x8xf32>
      %85 = arith.addf %81, %84 : vector<128x8xf32>
      %c0_26 = arith.constant 0 : index
      %86 = arith.index_cast %32 : i32 to index
      %c0_27 = arith.constant 0 : index
      %87 = vector.load %arg8[%c0_26, %86, %c0_27] : memref<1x256x8xf32, #tpu.memory_space<vmem>>, vector<1x128x8xf32>
      %88 = vector.shape_cast %87 : vector<1x128x8xf32> to vector<128x8xf32>
      %89 = vector.shape_cast %85 : vector<128x8xf32> to vector<1x128x8xf32>
      tpu.vector_store %arg8[%c0_26, %86, %c0_27], %89 {strides = array<i32>} : memref<1x256x8xf32, #tpu.memory_space<vmem>>, vector<1x128x8xf32>,
    }
    %c2_i32_13 = arith.constant 2 : i32
    return
  }
  func.func @transform_0(%arg0: i32) -> (i32, i32, i32) {
    %c0_i32 = arith.constant 0 : i32
    %c0_i32_0 = arith.constant 0 : i32
    %c0_i32_1 = arith.constant 0 : i32
    return %arg0, %c0_i32, %c0_i32_0 : i32, i32, i32
  }
  func.func @transform_1(%arg0: i32) -> (i32, i32) {
    %c0_i32 = arith.constant 0 : i32
    %c0_i32_0 = arith.constant 0 : i32
    %c0_i32_1 = arith.constant 0 : i32
    return %c0_i32, %c0_i32_0 : i32, i32
  }
  func.func @transform_2(%arg0: i32) -> (i32, i32) {
    %c0_i32 = arith.constant 0 : i32
    %c0_i32_0 = arith.constant 0 : i32
    %c0_i32_1 = arith.constant 0 : i32
    return %c0_i32, %c0_i32_0 : i32, i32
  }
  func.func @transform_3(%arg0: i32) -> (i32, i32) {
    %c0_i32 = arith.constant 0 : i32
    %c0_i32_0 = arith.constant 0 : i32
    %c0_i32_1 = arith.constant 0 : i32
    return %c0_i32, %c0_i32_0 : i32, i32
  }
  func.func @transform_4(%arg0: i32) -> (i32, i32) {
    %c0_i32 = arith.constant 0 : i32
    %c0_i32_0 = arith.constant 0 : i32
    %c0_i32_1 = arith.constant 0 : i32
    return %c0_i32, %c0_i32_0 : i32, i32
  }
  func.func @transform_5(%arg0: i32) -> (i32, i32) {
    %c0_i32 = arith.constant 0 : i32
    %c0_i32_0 = arith.constant 0 : i32
    %c0_i32_1 = arith.constant 0 : i32
    return %c0_i32, %c0_i32_0 : i32, i32
  }
  func.func @transform_6(%arg0: i32) -> (i32, i32) {
    %c0_i32 = arith.constant 0 : i32
    %c0_i32_0 = arith.constant 0 : i32
    %c0_i32_1 = arith.constant 0 : i32
    return %c0_i32, %c0_i32_0 : i32, i32
  }
  func.func @transform_7(%arg0: i32) -> (i32, i32, i32) {
    %c0_i32 = arith.constant 0 : i32
    %c0_i32_0 = arith.constant 0 : i32
    %c0_i32_1 = arith.constant 0 : i32
    return %arg0, %c0_i32, %c0_i32_0 : i32, i32, i32
  }
}

</mosaic_0001>

<llo_original>
// kernel: bottleneck.1
$region0: #{bottleneck.1}
  #allocation0 [shape = 'u32[]', space=smem, size = 0x4, offset = 0x4, fixed_abs, tag = 'smem constant byte address 0x4 - core index']
  #allocation1 [shape = 'u32[144,128]{1,0:T(1,128)}', space=vmem, size = 0x12000, scoped, tag = 'internal scratch']
  #allocation2 [shape = 'f32[304,4]{1,0:T(8,128)}', space=vmem, size = 0x26000, scoped, tag = 'scratch operand']
  %s0 = inlined_call_operand.vmem [shape: f32[2,256,8], index: 0, kind: input, shape index: {}]
  %s1 = inlined_call_operand.vmem [shape: f32[8,4], index: 1, kind: input, shape index: {}]
  %s2 = inlined_call_operand.vmem [shape: f32[1,4], index: 2, kind: input, shape index: {}]
  %s3 = inlined_call_operand.vmem [shape: f32[1,4], index: 3, kind: input, shape index: {}]
  %s4 = inlined_call_operand.vmem [shape: f32[4,72], index: 4, kind: input, shape index: {}]
  %s5 = inlined_call_operand.vmem [shape: f32[1,8], index: 5, kind: input, shape index: {}]
  %s6 = inlined_call_operand.vmem [shape: f32[1,8], index: 6, kind: input, shape index: {}]
  %s7 = inlined_call_operand.vmem [shape: f32[2,256,8], index: 7, kind: output, shape index: {}]
  %s8 = sld [smem:[#allocation0]]
  $region75: #{bottleneck.1} parent=0
    _
  %s10 = ssub.s32 1, %s8
  %s11 = scalar_select 0, %s10, %s8
  loop: start=0, step=1, limit=4
  $region2: #{bottleneck.1} parent=0 // loop_pre_header
    _
  $region3: #{bottleneck.1} parent=0 // loop_header
    %s13 = sphi 0, %s17
    %p14 = scmp.ge.s32.totalorder %s13, 4
    %s23 = sphi 0, %s25
    %s26 = sphi 0, %s23
    %s27 = sphi 0, %s26
    %s43 = sphi 0, %s27
    %s47 = sphi 0, %s47
    %s49 = sphi 0, %s47
    %s50 = sphi 0, %s49
    %s64 = sphi 0, %s50
    %s68 = sphi 0, %s68
    %s70 = sphi 0, %s68
    %s71 = sphi 0, %s70
    %s85 = sphi 0, %s71
    %s89 = sphi 0, %s89
    %s91 = sphi 0, %s89
    %s92 = sphi 0, %s91
    %s106 = sphi 0, %s92
    %s110 = sphi 0, %s110
    %s112 = sphi 0, %s110
    %s113 = sphi 0, %s112
    %s127 = sphi 0, %s113
    %s131 = sphi 0, %s131
    %s133 = sphi 0, %s131
    %s134 = sphi 0, %s133
    %s148 = sphi 0, %s134
    %s152 = sphi 0, %s152
    %s154 = sphi 0, %s152
    %s155 = sphi 0, %s154
    %s169 = sphi 0, %s155
    %s175 = sphi 0, %s177
    %s178 = sphi 0, %s175
    %s179 = sphi 0, %s178
    %s195 = sphi 0, %s179
  $region4: #{bottleneck.1} parent=0 // loop_header_branch
    %16 = sbr.rel (%p14) target = $region8
  $region5: #{bottleneck.1} parent=0 // loop_body
    %s18 = ssub.s32 %s13, 1
    %s19 = ssub.s32 %s13, 2
    %s20 = sadd.s32 %s13, 1
    %s21 = ssub.s32 %s13, %s20
    %p22 = scmp.eq.s32.totalorder %s21, 0
    %s24 = sadd.s32 %s23, 1
    %s25 = scalar_select %p22, %s23, %s24
    %p28 = pneg %p22
    %p29 = scmp.eq.s32.totalorder %s13, 1
    %p30 = por %p28, %p29
    %p31 = scmp.ne.s32.totalorder %s23, %s26
    %p32 = scmp.eq.s32.totalorder %s13, 0
    %p33 = por %p31, %p32
    %p34 = scmp.ne.s32.totalorder %s23, %s26
    %p35 = scmp.eq.s32.totalorder %s18, 1
    %p36 = por %p34, %p35
    %p37 = scmp.ne.s32.totalorder %s26, %s27
    %p38 = scmp.eq.s32.totalorder %s18, 0
    %p39 = por %p37, %p38
    %p40 = scmp.ne.s32.totalorder %s26, %s27
    %p41 = scmp.eq.s32.totalorder %s19, 1
    %p42 = por %p40, %p41
    %p44 = scmp.ne.s32.totalorder %s27, %s43
    %p45 = scmp.eq.s32.totalorder %s19, 0
    %p46 = por %p44, %p45
    %s48 = sadd.s32 %s47, 1
    %p51 = scmp.eq.s32.totalorder %s13, 1
    %p52 = scmp.ne.s32.totalorder %s47, %s49
    %p53 = scmp.eq.s32.totalorder %s13, 0
    %p54 = por %p52, %p53
    %p55 = scmp.ne.s32.totalorder %s47, %s49
    %p56 = scmp.eq.s32.totalorder %s18, 1
    %p57 = por %p55, %p56
    %p58 = scmp.ne.s32.totalorder %s49, %s50
    %p59 = scmp.eq.s32.totalorder %s18, 0
    %p60 = por %p58, %p59
    %p61 = scmp.ne.s32.totalorder %s49, %s50
    %p62 = scmp.eq.s32.totalorder %s19, 1
    %p63 = por %p61, %p62
    %p65 = scmp.ne.s32.totalorder %s50, %s64
    %p66 = scmp.eq.s32.totalorder %s19, 0
    %p67 = por %p65, %p66
    %s69 = sadd.s32 %s68, 1
    %p72 = scmp.eq.s32.totalorder %s13, 1
    %p73 = scmp.ne.s32.totalorder %s68, %s70
    %p74 = scmp.eq.s32.totalorder %s13, 0
    %p75 = por %p73, %p74
    %p76 = scmp.ne.s32.totalorder %s68, %s70
    %p77 = scmp.eq.s32.totalorder %s18, 1
    %p78 = por %p76, %p77
    %p79 = scmp.ne.s32.totalorder %s70, %s71
    %p80 = scmp.eq.s32.totalorder %s18, 0
    %p81 = por %p79, %p80
    %p82 = scmp.ne.s32.totalorder %s70, %s71
    %p83 = scmp.eq.s32.totalorder %s19, 1
    %p84 = por %p82, %p83
    %p86 = scmp.ne.s32.totalorder %s71, %s85
    %p87 = scmp.eq.s32.totalorder %s19, 0
    %p88 = por %p86, %p87
    %s90 = sadd.s32 %s89, 1
    %p93 = scmp.eq.s32.totalorder %s13, 1
    %p94 = scmp.ne.s32.totalorder %s89, %s91
    %p95 = scmp.eq.s32.totalorder %s13, 0
    %p96 = por %p94, %p95
    %p97 = scmp.ne.s32.totalorder %s89, %s91
    %p98 = scmp.eq.s32.totalorder %s18, 1
    %p99 = por %p97, %p98
    %p100 = scmp.ne.s32.totalorder %s91, %s92
    %p101 = scmp.eq.s32.totalorder %s18, 0
    %p102 = por %p100, %p101
    %p103 = scmp.ne.s32.totalorder %s91, %s92
    %p104 = scmp.eq.s32.totalorder %s19, 1
    %p105 = por %p103, %p104
    %p107 = scmp.ne.s32.totalorder %s92, %s106
    %p108 = scmp.eq.s32.totalorder %s19, 0
    %p109 = por %p107, %p108
    %s111 = sadd.s32 %s110, 1
    %p114 = scmp.eq.s32.totalorder %s13, 1
    %p115 = scmp.ne.s32.totalorder %s110, %s112
    %p116 = scmp.eq.s32.totalorder %s13, 0
    %p117 = por %p115, %p116
    %p118 = scmp.ne.s32.totalorder %s110, %s112
    %p119 = scmp.eq.s32.totalorder %s18, 1
    %p120 = por %p118, %p119
    %p121 = scmp.ne.s32.totalorder %s112, %s113
    %p122 = scmp.eq.s32.totalorder %s18, 0
    %p123 = por %p121, %p122
    %p124 = scmp.ne.s32.totalorder %s112, %s113
    %p125 = scmp.eq.s32.totalorder %s19, 1
    %p126 = por %p124, %p125
    %p128 = scmp.ne.s32.totalorder %s113, %s127
    %p129 = scmp.eq.s32.totalorder %s19, 0
    %p130 = por %p128, %p129
    %s132 = sadd.s32 %s131, 1
    %p135 = scmp.eq.s32.totalorder %s13, 1
    %p136 = scmp.ne.s32.totalorder %s131, %s133
    %p137 = scmp.eq.s32.totalorder %s13, 0
    %p138 = por %p136, %p137
    %p139 = scmp.ne.s32.totalorder %s131, %s133
    %p140 = scmp.eq.s32.totalorder %s18, 1
    %p141 = por %p139, %p140
    %p142 = scmp.ne.s32.totalorder %s133, %s134
    %p143 = scmp.eq.s32.totalorder %s18, 0
    %p144 = por %p142, %p143
    %p145 = scmp.ne.s32.totalorder %s133, %s134
    %p146 = scmp.eq.s32.totalorder %s19, 1
    %p147 = por %p145, %p146
    %p149 = scmp.ne.s32.totalorder %s134, %s148
    %p150 = scmp.eq.s32.totalorder %s19, 0
    %p151 = por %p149, %p150
    %s153 = sadd.s32 %s152, 1
    %p156 = scmp.eq.s32.totalorder %s13, 1
    %p157 = scmp.ne.s32.totalorder %s152, %s154
    %p158 = scmp.eq.s32.totalorder %s13, 0
    %p159 = por %p157, %p158
    %p160 = scmp.ne.s32.totalorder %s152, %s154
    %p161 = scmp.eq.s32.totalorder %s18, 1
    %p162 = por %p160, %p161
    %p163 = scmp.ne.s32.totalorder %s154, %s155
    %p164 = scmp.eq.s32.totalorder %s18, 0
    %p165 = por %p163, %p164
    %p166 = scmp.ne.s32.totalorder %s154, %s155
    %p167 = scmp.eq.s32.totalorder %s19, 1
    %p168 = por %p166, %p167
    %p170 = scmp.ne.s32.totalorder %s155, %s169
    %p171 = scmp.eq.s32.totalorder %s19, 0
    %p172 = por %p170, %p171
    %s173 = ssub.s32 %s13, %s20
    %p174 = scmp.eq.s32.totalorder %s173, 0
    %s176 = sadd.s32 %s175, 1
    %s177 = scalar_select %p174, %s175, %s176
    %p180 = pneg %p174
    %p181 = scmp.eq.s32.totalorder %s13, 1
    %p182 = por %p180, %p181
    %p183 = scmp.ne.s32.totalorder %s175, %s178
    %p184 = scmp.eq.s32.totalorder %s13, 0
    %p185 = por %p183, %p184
    %p186 = scmp.ne.s32.totalorder %s175, %s178
    %p187 = scmp.eq.s32.totalorder %s18, 1
    %p188 = por %p186, %p187
    %p189 = scmp.ne.s32.totalorder %s178, %s179
    %p190 = scmp.eq.s32.totalorder %s18, 0
    %p191 = por %p189, %p190
    %p192 = scmp.ne.s32.totalorder %s178, %s179
    %p193 = scmp.eq.s32.totalorder %s19, 1
    %p194 = por %p192, %p193
    %p196 = scmp.ne.s32.totalorder %s179, %s195
    %p197 = scmp.eq.s32.totalorder %s19, 0
    %p198 = por %p196, %p197
    %p199 = scmp.le.s32.totalorder 1, %s13
    %p200 = scmp.lt.s32.totalorder %s13, 3
    %p201 = pnand %p199, %p200
    %p202 = pneg %p201
    // Predicated region
    $region9: #{bottleneck.1} parent=5 // pred_check
      _
    $region10: #{bottleneck.1} parent=5 // pred_check_branch
      %204 = sbr.rel (%p201) target = $region12
    $region11: #{bottleneck.1} parent=5 // pred_region
      %s205 = ssub.s32 %s13, 1
      // Predicated region
      $region13: #{bottleneck.1} parent=11 // pred_check
        %p206 = pneg %p60
      $region14: #{bottleneck.1} parent=11 // pred_check_branch
        %208 = sbr.rel (%p206) target = $region16
      $region15: #{bottleneck.1} parent=11 // pred_region
        _
      $region16: #{bottleneck.1} parent=11 // pred_fallthru
        _
      // Predicated region
      $region17: #{bottleneck.1} parent=11 // pred_check
        %p209 = pneg %p81
      $region18: #{bottleneck.1} parent=11 // pred_check_branch
        %211 = sbr.rel (%p209) target = $region20
      $region19: #{bottleneck.1} parent=11 // pred_region
        _
      $region20: #{bottleneck.1} parent=11 // pred_fallthru
        _
      // Predicated region
      $region21: #{bottleneck.1} parent=11 // pred_check
        %p212 = pneg %p102
      $region22: #{bottleneck.1} parent=11 // pred_check_branch
        %214 = sbr.rel (%p212) target = $region24
      $region23: #{bottleneck.1} parent=11 // pred_region
        _
      $region24: #{bottleneck.1} parent=11 // pred_fallthru
        _
      // Predicated region
      $region25: #{bottleneck.1} parent=11 // pred_check
        %p215 = pneg %p123
      $region26: #{bottleneck.1} parent=11 // pred_check_branch
        %217 = sbr.rel (%p215) target = $region28
      $region27: #{bottleneck.1} parent=11 // pred_region
        _
      $region28: #{bottleneck.1} parent=11 // pred_fallthru
        _
      // Predicated region
      $region29: #{bottleneck.1} parent=11 // pred_check
        %p218 = pneg %p144
      $region30: #{bottleneck.1} parent=11 // pred_check_branch
        %220 = sbr.rel (%p218) target = $region32
      $region31: #{bottleneck.1} parent=11 // pred_region
        _
      $region32: #{bottleneck.1} parent=11 // pred_fallthru
        _
      // Predicated region
      $region33: #{bottleneck.1} parent=11 // pred_check
        %p221 = pneg %p165
      $region34: #{bottleneck.1} parent=11 // pred_check_branch
        %223 = sbr.rel (%p221) target = $region36
      $region35: #{bottleneck.1} parent=11 // pred_region
        _
      $region36: #{bottleneck.1} parent=11 // pred_fallthru
        _
    $region12: #{bottleneck.1} parent=5 // pred_fallthru
      _
    %p224 = scmp.lt.s32.totalorder %s13, 2
    // Predicated region
    $region37: #{bottleneck.1} parent=5 // pred_check
      %p225 = pneg %p224
    $region38: #{bottleneck.1} parent=5 // pred_check_branch
      %227 = sbr.rel (%p225) target = $region40
    $region39: #{bottleneck.1} parent=5 // pred_region
      // Predicated region
      $region41: #{bottleneck.1} parent=39 // pred_check
        %p228 = pneg %p33
      $region42: #{bottleneck.1} parent=39 // pred_check_branch
        %230 = sbr.rel (%p228) target = $region44
      $region43: #{bottleneck.1} parent=39 // pred_region
        %p231 = scmp.lt.s32.totalorder %s13, 1
        %s232 = scalar_select %p231, %s13, 1
        %s233 = smul.addr %s232, 32
        %s234 = smul.addr %s233, 8
        %s235 = scalar_lea.vmem %s0, %s234
      $region44: #{bottleneck.1} parent=39 // pred_fallthru
        _
    $region40: #{bottleneck.1} parent=5 // pred_fallthru
      _
    %p236 = scmp.le.s32.totalorder 1, %s13
    %p237 = scmp.lt.s32.totalorder %s13, 3
    %p238 = pnand %p236, %p237
    %p239 = pneg %p238
    // Predicated region
    $region45: #{bottleneck.1} parent=5 // pred_check
      _
    $region46: #{bottleneck.1} parent=5 // pred_check_branch
      %241 = sbr.rel (%p238) target = $region48
    $region47: #{bottleneck.1} parent=5 // pred_region
      %s242 = ssub.s32 %s13, 1
      %p243 = scmp.lt.s32.totalorder %s18, 1
      %s244 = scalar_select %p243, %s18, 1
      %s245 = smul.addr %s244, 32
      %s246 = smul.addr %s245, 8
      %s247 = scalar_lea.vmem %s0, %s246
      %p248 = pneg %p39
      %p249 = pneg %p36
      %p250 = pneg %p60
      %p251 = pneg %p57
      %p252 = pneg %p81
      %p253 = pneg %p78
      %p254 = pneg %p102
      %p255 = pneg %p99
      %p256 = pneg %p123
      %p257 = pneg %p120
      %p258 = pneg %p144
      %p259 = pneg %p141
      %p260 = pneg %p165
      %p261 = pneg %p162
      %p262 = pneg %p191
      %p263 = pneg %p188
      %p264 = scmp.lt.s32.totalorder %s18, 1
      %s265 = scalar_select %p264, %s18, 1
      %s266 = smul.addr %s265, 32
      %s267 = smul.addr %s266, 8
      %s268 = scalar_lea.vmem %s7, %s267
      %p269 = scmp.lt.s32.totalorder %s18, 1
      %s270 = scalar_select %p269, %s18, 1
      %s271 = smul.addr %s270, 32
      %s272 = smul.addr %s271, 8
      %s273 = scalar_lea.vmem %s0, %s272
      %p274 = scmp.lt.s32.totalorder %s18, 1
      %s275 = scalar_select %p274, %s18, 1
      %s276 = smul.addr %s275, 32
      %s277 = smul.addr %s276, 8
      %s278 = scalar_lea.vmem %s7, %s277
      %vm279 = vcmask 31744
      %280 = vst.msk [vmem:[#allocation2] sm:$0xff] %vm279, 0.0
      %281 = vst.msk [vmem:[#allocation2 + $0x8] sm:$0xff] %vm279, 0.0
      %282 = vst.msk [vmem:[#allocation2 + $0x10] sm:$0xff] %vm279, 0.0
      %283 = vst.msk [vmem:[#allocation2 + $0x118] sm:$0xff] %vm279, 0.0
      %284 = vst.msk [vmem:[#allocation2 + $0x120] sm:$0xff] %vm279, 0.0
      %285 = vst.msk [vmem:[#allocation2 + $0x128] sm:$0xff] %vm279, 0.0
      loop: start=0, step=1, limit=2
      $region49: #{bottleneck.1} parent=47 // loop_pre_header
        _
      $region50: #{bottleneck.1} parent=47 // loop_header
        %s287 = sphi 0, %s291
        %p288 = scmp.ge.s32.totalorder %s287, 2
      $region51: #{bottleneck.1} parent=47 // loop_header_branch
        %290 = sbr.rel (%p288) target = $region55
      $region52: #{bottleneck.1} parent=47 // loop_body
        %s292 = smul.u32 %s287, 128
        %s293 = scalar_lea.vmem %s273, %s292
        %v294 = vld [vmem:[%s293] sm:$0xff]
        %v295 = vld [vmem:[%s293 + $0x8] sm:$0xff]
        %v296 = vld [vmem:[%s293 + $0x10] sm:$0xff]
        %v297 = vld [vmem:[%s293 + $0x18] sm:$0xff]
        %v298 = vld [vmem:[%s293 + $0x20] sm:$0xff]
        %v299 = vld [vmem:[%s293 + $0x28] sm:$0xff]
        %v300 = vld [vmem:[%s293 + $0x30] sm:$0xff]
        %v301 = vld [vmem:[%s293 + $0x38] sm:$0xff]
        %v302 = vld [vmem:[%s293 + $0x40] sm:$0xff]
        %v303 = vld [vmem:[%s293 + $0x48] sm:$0xff]
        %v304 = vld [vmem:[%s293 + $0x50] sm:$0xff]
        %v305 = vld [vmem:[%s293 + $0x58] sm:$0xff]
        %v306 = vld [vmem:[%s293 + $0x60] sm:$0xff]
        %v307 = vld [vmem:[%s293 + $0x68] sm:$0xff]
        %v308 = vld [vmem:[%s293 + $0x70] sm:$0xff]
        %v309 = vld [vmem:[%s293 + $0x78] sm:$0xff]
        %v310 = vld [vmem:[%s1] sm:$0xff]
        %vm311 = vcmask 64512
        %v313 = vsel %vm311, %v294, 0
        %v316 = vsel %vm311, %v295, 0
        %v319 = vsel %vm311, %v296, 0
        %v322 = vsel %vm311, %v297, 0
        %v325 = vsel %vm311, %v298, 0
        %v328 = vsel %vm311, %v299, 0
        %v331 = vsel %vm311, %v300, 0
        %v334 = vsel %vm311, %v301, 0
        %v337 = vsel %vm311, %v302, 0
        %v340 = vsel %vm311, %v303, 0
        %v343 = vsel %vm311, %v304, 0
        %v346 = vsel %vm311, %v305, 0
        %v349 = vsel %vm311, %v306, 0
        %v352 = vsel %vm311, %v307, 0
        %v355 = vsel %vm311, %v308, 0
        %v358 = vsel %vm311, %v309, 0
        %360 = vmatprep.subr.mxu0 0.0
        %361 = vmatpush1.msra.mxu0 %v310
        %362 = vmatprep.subr.mxu0 0.0
        %363 = vmatpush1.msra.mxu0 0.0
        %364 = vmatprep.subr.mxu0 0.0
        %365 = vmatpush1.msra.mxu0 0.0
        %366 = vmatprep.subr.mxu0 0.0
        %367 = vmatpush1.msra.mxu0 0.0
        %368 = vmatprep.subr.mxu0 0.0
        %369 = vmatpush1.msra.mxu0 0.0
        %370 = vmatprep.subr.mxu0 0.0
        %371 = vmatpush1.msra.mxu0 0.0
        %372 = vmatprep.subr.mxu0 0.0
        %373 = vmatpush1.msra.mxu0 0.0
        %374 = vmatprep.subr.mxu0 0.0
        %375 = vmatpush1.msra.mxu0 0.0
        %376 = vmatprep.subr.mxu0 0.0
        %377 = vmatpush1.msra.mxu0 0.0
        %378 = vmatprep.subr.mxu0 0.0
        %379 = vmatpush1.msra.mxu0 0.0
        %380 = vmatprep.subr.mxu0 0.0
        %381 = vmatpush1.msra.mxu0 0.0
        %382 = vmatprep.subr.mxu0 0.0
        %383 = vmatpush1.msra.mxu0 0.0
        %384 = vmatprep.subr.mxu0 0.0
        %385 = vmatpush1.msra.mxu0 0.0
        %386 = vmatprep.subr.mxu0 0.0
        %387 = vmatpush1.msra.mxu0 0.0
        %388 = vmatprep.subr.mxu0 0.0
        %389 = vmatpush1.msra.mxu0 0.0
        %390 = vmatprep.subr.mxu0 0.0
        %391 = vmatpush1.msra.mxu0 0.0
        %392 = vmatprep.subr.mxu0 0.0
        %393 = vmatpush1.msra.mxu0 0.0
        %394 = vmatprep.subr.mxu0 0.0
        %395 = vmatpush1.msra.mxu0 0.0
        %396 = vmatprep.subr.mxu0 0.0
        %397 = vmatpush1.msra.mxu0 0.0
        %398 = vmatprep.subr.mxu0 0.0
        %399 = vmatpush1.msra.mxu0 0.0
        %400 = vmatprep.subr.mxu0 0.0
        %401 = vmatpush1.msra.mxu0 0.0
        %402 = vmatprep.subr.mxu0 0.0
        %403 = vmatpush1.msra.mxu0 0.0
        %404 = vmatprep.subr.mxu0 0.0
        %405 = vmatpush1.msra.mxu0 0.0
        %406 = vmatprep.subr.mxu0 0.0
        %407 = vmatpush1.msra.mxu0 0.0
        %408 = vmatprep.subr.mxu0 0.0
        %409 = vmatpush1.msra.mxu0 0.0
        %410 = vmatprep.subr.mxu0 0.0
        %411 = vmatpush1.msra.mxu0 0.0
        %412 = vmatprep.subr.mxu0 0.0
        %413 = vmatpush1.msra.mxu0 0.0
        %414 = vmatprep.subr.mxu0 0.0
        %415 = vmatpush1.msra.mxu0 0.0
        %416 = vmatprep.subr.mxu0 0.0
        %417 = vmatpush1.msra.mxu0 0.0
        %418 = vmatprep.subr.mxu0 0.0
        %419 = vmatpush1.msra.mxu0 0.0
        %420 = vmatprep.subr.mxu0 0.0
        %421 = vmatpush1.msra.mxu0 0.0
        %422 = vmatprep.subr.mxu0 0.0
        %423 = vmatpush1.msra.mxu0 0.0
        %424 = vmatprep.mubr.f32.mxu0 0.0
        %425 = vmatmul.mubr.f32.gmra.mrb[0].mxu0 %v313
        %v426 = vpop.f32.mrb[0].mxu0
        %v427 = vadd.f32 0.0, %v426
        %v428 = vpop.f32.mrb[0].mxu0
        %429 = vmatprep.mubr.f32.mxu0 0.0
        %430 = vmatmul.mubr.f32.gmra.mrb[0].mxu0 %v316
        %v431 = vpop.f32.mrb[0].mxu0
        %v432 = vadd.f32 0.0, %v431
        %v433 = vpop.f32.mrb[0].mxu0
        %434 = vmatprep.mubr.f32.mxu0 0.0
        %435 = vmatmul.mubr.f32.gmra.mrb[0].mxu0 %v319
        %v436 = vpop.f32.mrb[0].mxu0
        %v437 = vadd.f32 0.0, %v436
        %v438 = vpop.f32.mrb[0].mxu0
        %439 = vmatprep.mubr.f32.mxu0 0.0
        %440 = vmatmul.mubr.f32.gmra.mrb[0].mxu0 %v322
        %v441 = vpop.f32.mrb[0].mxu0
        %v442 = vadd.f32 0.0, %v441
        %v443 = vpop.f32.mrb[0].mxu0
        %444 = vmatprep.mubr.f32.mxu0 0.0
        %445 = vmatmul.mubr.f32.gmra.mrb[0].mxu0 %v325
        %v446 = vpop.f32.mrb[0].mxu0
        %v447 = vadd.f32 0.0, %v446
        %v448 = vpop.f32.mrb[0].mxu0
        %449 = vmatprep.mubr.f32.mxu0 0.0
        %450 = vmatmul.mubr.f32.gmra.mrb[0].mxu0 %v328
        %v451 = vpop.f32.mrb[0].mxu0
        %v452 = vadd.f32 0.0, %v451
        %v453 = vpop.f32.mrb[0].mxu0
        %454 = vmatprep.mubr.f32.mxu0 0.0
        %455 = vmatmul.mubr.f32.gmra.mrb[0].mxu0 %v331
        %v456 = vpop.f32.mrb[0].mxu0
        %v457 = vadd.f32 0.0, %v456
        %v458 = vpop.f32.mrb[0].mxu0
        %459 = vmatprep.mubr.f32.mxu0 0.0
        %460 = vmatmul.mubr.f32.gmra.mrb[0].mxu0 %v334
        %v461 = vpop.f32.mrb[0].mxu0
        %v462 = vadd.f32 0.0, %v461
        %v463 = vpop.f32.mrb[0].mxu0
        %464 = vmatprep.mubr.f32.mxu0 0.0
        %465 = vmatmul.mubr.f32.gmra.mrb[0].mxu0 %v337
        %v466 = vpop.f32.mrb[0].mxu0
        %v467 = vadd.f32 0.0, %v466
        %v468 = vpop.f32.mrb[0].mxu0
        %469 = vmatprep.mubr.f32.mxu0 0.0
        %470 = vmatmul.mubr.f32.gmra.mrb[0].mxu0 %v340
        %v471 = vpop.f32.mrb[0].mxu0
        %v472 = vadd.f32 0.0, %v471
        %v473 = vpop.f32.mrb[0].mxu0
        %474 = vmatprep.mubr.f32.mxu0 0.0
        %475 = vmatmul.mubr.f32.gmra.mrb[0].mxu0 %v343
        %v476 = vpop.f32.mrb[0].mxu0
        %v477 = vadd.f32 0.0, %v476
        %v478 = vpop.f32.mrb[0].mxu0
        %479 = vmatprep.mubr.f32.mxu0 0.0
        %480 = vmatmul.mubr.f32.gmra.mrb[0].mxu0 %v346
        %v481 = vpop.f32.mrb[0].mxu0
        %v482 = vadd.f32 0.0, %v481
        %v483 = vpop.f32.mrb[0].mxu0
        %484 = vmatprep.mubr.f32.mxu0 0.0
        %485 = vmatmul.mubr.f32.gmra.mrb[0].mxu0 %v349
        %v486 = vpop.f32.mrb[0].mxu0
        %v487 = vadd.f32 0.0, %v486
        %v488 = vpop.f32.mrb[0].mxu0
        %489 = vmatprep.mubr.f32.mxu0 0.0
        %490 = vmatmul.mubr.f32.gmra.mrb[0].mxu0 %v352
        %v491 = vpop.f32.mrb[0].mxu0
        %v492 = vadd.f32 0.0, %v491
        %v493 = vpop.f32.mrb[0].mxu0
        %494 = vmatprep.mubr.f32.mxu0 0.0
        %495 = vmatmul.mubr.f32.gmra.mrb[0].mxu0 %v355
        %v496 = vpop.f32.mrb[0].mxu0
        %v497 = vadd.f32 0.0, %v496
        %v498 = vpop.f32.mrb[0].mxu0
        %499 = vmatprep.mubr.f32.mxu0 0.0
        %500 = vmatmul.mubr.f32.gmra.mrb[0].mxu0 %v358
        %v501 = vpop.f32.mrb[0].mxu0
        %v502 = vadd.f32 0.0, %v501
        %v503 = vpop.f32.mrb[0].mxu0
        %504 = vdwg.mxu0
        %v505 = vld [vmem:[%s2] sm:$0x1]
        %v507 = vlaneseq
        %v508 = vshrl.u32 %v507, 7
        %v509 = vsub.s32 0, %v508
        %v510 = vrot.slane %v505, %v509
        %v512 = vmul.f32 %v427, %v510
        %v513 = vmul.f32 %v432, %v510
        %v514 = vmul.f32 %v437, %v510
        %v515 = vmul.f32 %v442, %v510
        %v516 = vmul.f32 %v447, %v510
        %v517 = vmul.f32 %v452, %v510
        %v518 = vmul.f32 %v457, %v510
        %v519 = vmul.f32 %v462, %v510
        %v520 = vmul.f32 %v467, %v510
        %v521 = vmul.f32 %v472, %v510
        %v522 = vmul.f32 %v477, %v510
        %v523 = vmul.f32 %v482, %v510
        %v524 = vmul.f32 %v487, %v510
        %v525 = vmul.f32 %v492, %v510
        %v526 = vmul.f32 %v497, %v510
        %v527 = vmul.f32 %v502, %v510
        %v528 = vld [vmem:[%s3] sm:$0x1]
        %v530 = vlaneseq
        %v531 = vshrl.u32 %v530, 7
        %v532 = vsub.s32 0, %v531
        %v533 = vrot.slane %v528, %v532
        %v535 = vadd.f32 %v512, %v533
        %v536 = vadd.f32 %v513, %v533
        %v537 = vadd.f32 %v514, %v533
        %v538 = vadd.f32 %v515, %v533
        %v539 = vadd.f32 %v516, %v533
        %v540 = vadd.f32 %v517, %v533
        %v541 = vadd.f32 %v518, %v533
        %v542 = vadd.f32 %v519, %v533
        %v543 = vadd.f32 %v520, %v533
        %v544 = vadd.f32 %v521, %v533
        %v545 = vadd.f32 %v522, %v533
        %v546 = vadd.f32 %v523, %v533
        %v547 = vadd.f32 %v524, %v533
        %v548 = vadd.f32 %v525, %v533
        %v549 = vadd.f32 %v526, %v533
        %v550 = vadd.f32 %v527, %v533
        %v551 = vxor.u32 %v535, 2147483648
        %v552 = vxor.u32 %v536, 2147483648
        %v553 = vxor.u32 %v537, 2147483648
        %v554 = vxor.u32 %v538, 2147483648
        %v555 = vxor.u32 %v539, 2147483648
        %v556 = vxor.u32 %v540, 2147483648
        %v557 = vxor.u32 %v541, 2147483648
        %v558 = vxor.u32 %v542, 2147483648
        %v559 = vxor.u32 %v543, 2147483648
        %v560 = vxor.u32 %v544, 2147483648
        %v561 = vxor.u32 %v545, 2147483648
        %v562 = vxor.u32 %v546, 2147483648
        %v563 = vxor.u32 %v547, 2147483648
        %v564 = vxor.u32 %v548, 2147483648
        %v565 = vxor.u32 %v549, 2147483648
        %v566 = vxor.u32 %v550, 2147483648
        %v567 = vmul.f32 %v551, 1.442695
        %v568 = vpow.pop %v567
        %v569 = vmul.f32 %v552, 1.442695
        %v570 = vpow.pop %v569
        %v571 = vmul.f32 %v553, 1.442695
        %v572 = vpow.pop %v571
        %v573 = vmul.f32 %v554, 1.442695
        %v574 = vpow.pop %v573
        %v575 = vmul.f32 %v555, 1.442695
        %v576 = vpow.pop %v575
        %v577 = vmul.f32 %v556, 1.442695
        %v578 = vpow.pop %v577
        %v579 = vmul.f32 %v557, 1.442695
        %v580 = vpow.pop %v579
        %v581 = vmul.f32 %v558, 1.442695
        %v582 = vpow.pop %v581
        %v583 = vmul.f32 %v559, 1.442695
        %v584 = vpow.pop %v583
        %v585 = vmul.f32 %v560, 1.442695
        %v586 = vpow.pop %v585
        %v587 = vmul.f32 %v561, 1.442695
        %v588 = vpow.pop %v587
        %v589 = vmul.f32 %v562, 1.442695
        %v590 = vpow.pop %v589
        %v591 = vmul.f32 %v563, 1.442695
        %v592 = vpow.pop %v591
        %v593 = vmul.f32 %v564, 1.442695
        %v594 = vpow.pop %v593
        %v595 = vmul.f32 %v565, 1.442695
        %v596 = vpow.pop %v595
        %v597 = vmul.f32 %v566, 1.442695
        %v598 = vpow.pop %v597
        %v599 = vadd.f32 %v568, 1.0
        %v600 = vadd.f32 %v570, 1.0
        %v601 = vadd.f32 %v572, 1.0
        %v602 = vadd.f32 %v574, 1.0
        %v603 = vadd.f32 %v576, 1.0
        %v604 = vadd.f32 %v578, 1.0
        %v605 = vadd.f32 %v580, 1.0
        %v606 = vadd.f32 %v582, 1.0
        %v607 = vadd.f32 %v584, 1.0
        %v608 = vadd.f32 %v586, 1.0
        %v609 = vadd.f32 %v588, 1.0
        %v610 = vadd.f32 %v590, 1.0
        %v611 = vadd.f32 %v592, 1.0
        %v612 = vadd.f32 %v594, 1.0
        %v613 = vadd.f32 %v596, 1.0
        %v614 = vadd.f32 %v598, 1.0
        %v615 = vrcp.pop %v599
        %v616 = vmul.f32 1.0, %v615
        %v617 = vrcp.pop %v600
        %v618 = vmul.f32 1.0, %v617
        %v619 = vrcp.pop %v601
        %v620 = vmul.f32 1.0, %v619
        %v621 = vrcp.pop %v602
        %v622 = vmul.f32 1.0, %v621
        %v623 = vrcp.pop %v603
        %v624 = vmul.f32 1.0, %v623
        %v625 = vrcp.pop %v604
        %v626 = vmul.f32 1.0, %v625
        %v627 = vrcp.pop %v605
        %v628 = vmul.f32 1.0, %v627
        %v629 = vrcp.pop %v606
        %v630 = vmul.f32 1.0, %v629
        %v631 = vrcp.pop %v607
        %v632 = vmul.f32 1.0, %v631
        %v633 = vrcp.pop %v608
        %v634 = vmul.f32 1.0, %v633
        %v635 = vrcp.pop %v609
        %v636 = vmul.f32 1.0, %v635
        %v637 = vrcp.pop %v610
        %v638 = vmul.f32 1.0, %v637
        %v639 = vrcp.pop %v611
        %v640 = vmul.f32 1.0, %v639
        %v641 = vrcp.pop %v612
        %v642 = vmul.f32 1.0, %v641
        %v643 = vrcp.pop %v613
        %v644 = vmul.f32 1.0, %v643
        %v645 = vrcp.pop %v614
        %v646 = vmul.f32 1.0, %v645
        %v647 = vmul.f32 %v535, %v616
        %v648 = vmul.f32 %v536, %v618
        %v649 = vmul.f32 %v537, %v620
        %v650 = vmul.f32 %v538, %v622
        %v651 = vmul.f32 %v539, %v624
        %v652 = vmul.f32 %v540, %v626
        %v653 = vmul.f32 %v541, %v628
        %v654 = vmul.f32 %v542, %v630
        %v655 = vmul.f32 %v543, %v632
        %v656 = vmul.f32 %v544, %v634
        %v657 = vmul.f32 %v545, %v636
        %v658 = vmul.f32 %v546, %v638
        %v659 = vmul.f32 %v547, %v640
        %v660 = vmul.f32 %v548, %v642
        %v661 = vmul.f32 %v549, %v644
        %v662 = vmul.f32 %v550, %v646
        %s663 = sadd.s32 %s292, 24
        %s664 = scalar_lea.vmem [#allocation2], %s663
        %665 = vst.msk [vmem:[%s664] sm:$0xff] %vm279, %v647
        %666 = vst.msk [vmem:[%s664 + $0x8] sm:$0xff] %vm279, %v648
        %667 = vst.msk [vmem:[%s664 + $0x10] sm:$0xff] %vm279, %v649
        %668 = vst.msk [vmem:[%s664 + $0x18] sm:$0xff] %vm279, %v650
        %669 = vst.msk [vmem:[%s664 + $0x20] sm:$0xff] %vm279, %v651
        %670 = vst.msk [vmem:[%s664 + $0x28] sm:$0xff] %vm279, %v652
        %671 = vst.msk [vmem:[%s664 + $0x30] sm:$0xff] %vm279, %v653
        %672 = vst.msk [vmem:[%s664 + $0x38] sm:$0xff] %vm279, %v654
        %673 = vst.msk [vmem:[%s664 + $0x40] sm:$0xff] %vm279, %v655
        %674 = vst.msk [vmem:[%s664 + $0x48] sm:$0xff] %vm279, %v656
        %675 = vst.msk [vmem:[%s664 + $0x50] sm:$0xff] %vm279, %v657
        %676 = vst.msk [vmem:[%s664 + $0x58] sm:$0xff] %vm279, %v658
        %677 = vst.msk [vmem:[%s664 + $0x60] sm:$0xff] %vm279, %v659
        %678 = vst.msk [vmem:[%s664 + $0x68] sm:$0xff] %vm279, %v660
        %679 = vst.msk [vmem:[%s664 + $0x70] sm:$0xff] %vm279, %v661
        %680 = vst.msk [vmem:[%s664 + $0x78] sm:$0xff] %vm279, %v662
      $region53: #{bottleneck.1} parent=47 // loop_footer
        %s291 = sadd.s32 1, %s287
      $region54: #{bottleneck.1} parent=47 // loop_footer_branch
        %286 = sbr.rel target = $region50
      $region55: #{bottleneck.1} parent=47 // loop_exit
        _
      %v681 = vlaneseq
      %v682 = vshrl.u32 %v681, 7
      %v683 = vadd.s32 %v682, 8
      %v684 = vadd.s32 %v682, 16
      %v685 = vadd.s32 %v682, 24
      %v686 = vadd.s32 %v682, 32
      %v687 = vadd.s32 %v682, 40
      %v688 = vadd.s32 %v682, 48
      %v689 = vadd.s32 %v682, 56
      %v690 = vadd.s32 %v682, 64
      %v691 = vadd.s32 %v682, 72
      %v692 = vadd.s32 %v682, 80
      %v693 = vadd.s32 %v682, 88
      %v694 = vadd.s32 %v682, 96
      %v695 = vadd.s32 %v682, 104
      %v696 = vadd.s32 %v682, 112
      %v697 = vadd.s32 %v682, 120
      %vm698 = vcmp.lt.s32.totalorder %v682, 0
      %v699 = vsub.s32 0, %v682
      %v700 = vsel %vm698, %v699, %v682
      %v701 = vshrl.u32 %v700, 4
      %v702 = vand.u32 %v700, 15
      %v703 = vsub.s32 0, %v702
      %v704 = vsel %vm698, %v703, %v702
      %vm705 = vcmp.lt.s32.totalorder %v683, 0
      %v706 = vsub.s32 0, %v683
      %v707 = vsel %vm705, %v706, %v683
      %v708 = vshrl.u32 %v707, 4
      %v709 = vand.u32 %v707, 15
      %v710 = vsub.s32 0, %v709
      %v711 = vsel %vm705, %v710, %v709
      %vm712 = vcmp.lt.s32.totalorder %v684, 0
      %v713 = vsub.s32 0, %v684
      %v714 = vsel %vm712, %v713, %v684
      %v715 = vshrl.u32 %v714, 4
      %v716 = vand.u32 %v714, 15
      %v717 = vsub.s32 0, %v716
      %v718 = vsel %vm712, %v717, %v716
      %vm719 = vcmp.lt.s32.totalorder %v685, 0
      %v720 = vsub.s32 0, %v685
      %v721 = vsel %vm719, %v720, %v685
      %v722 = vshrl.u32 %v721, 4
      %v723 = vand.u32 %v721, 15
      %v724 = vsub.s32 0, %v723
      %v725 = vsel %vm719, %v724, %v723
      %vm726 = vcmp.lt.s32.totalorder %v686, 0
      %v727 = vsub.s32 0, %v686
      %v728 = vsel %vm726, %v727, %v686
      %v729 = vshrl.u32 %v728, 4
      %v730 = vand.u32 %v728, 15
      %v731 = vsub.s32 0, %v730
      %v732 = vsel %vm726, %v731, %v730
      %vm733 = vcmp.lt.s32.totalorder %v687, 0
      %v734 = vsub.s32 0, %v687
      %v735 = vsel %vm733, %v734, %v687
      %v736 = vshrl.u32 %v735, 4
      %v737 = vand.u32 %v735, 15
      %v738 = vsub.s32 0, %v737
      %v739 = vsel %vm733, %v738, %v737
      %vm740 = vcmp.lt.s32.totalorder %v688, 0
      %v741 = vsub.s32 0, %v688
      %v742 = vsel %vm740, %v741, %v688
      %v743 = vshrl.u32 %v742, 4
      %v744 = vand.u32 %v742, 15
      %v745 = vsub.s32 0, %v744
      %v746 = vsel %vm740, %v745, %v744
      %vm747 = vcmp.lt.s32.totalorder %v689, 0
      %v748 = vsub.s32 0, %v689
      %v749 = vsel %vm747, %v748, %v689
      %v750 = vshrl.u32 %v749, 4
      %v751 = vand.u32 %v749, 15
      %v752 = vsub.s32 0, %v751
      %v753 = vsel %vm747, %v752, %v751
      %vm754 = vcmp.lt.s32.totalorder %v690, 0
      %v755 = vsub.s32 0, %v690
      %v756 = vsel %vm754, %v755, %v690
      %v757 = vshrl.u32 %v756, 4
      %v758 = vand.u32 %v756, 15
      %v759 = vsub.s32 0, %v758
      %v760 = vsel %vm754, %v759, %v758
      %vm761 = vcmp.lt.s32.totalorder %v691, 0
      %v762 = vsub.s32 0, %v691
      %v763 = vsel %vm761, %v762, %v691
      %v764 = vshrl.u32 %v763, 4
      %v765 = vand.u32 %v763, 15
      %v766 = vsub.s32 0, %v765
      %v767 = vsel %vm761, %v766, %v765
      %vm768 = vcmp.lt.s32.totalorder %v692, 0
      %v769 = vsub.s32 0, %v692
      %v770 = vsel %vm768, %v769, %v692
      %v771 = vshrl.u32 %v770, 4
      %v772 = vand.u32 %v770, 15
      %v773 = vsub.s32 0, %v772
      %v774 = vsel %vm768, %v773, %v772
      %vm775 = vcmp.lt.s32.totalorder %v693, 0
      %v776 = vsub.s32 0, %v693
      %v777 = vsel %vm775, %v776, %v693
      %v778 = vshrl.u32 %v777, 4
      %v779 = vand.u32 %v777, 15
      %v780 = vsub.s32 0, %v779
      %v781 = vsel %vm775, %v780, %v779
      %vm782 = vcmp.lt.s32.totalorder %v694, 0
      %v783 = vsub.s32 0, %v694
      %v784 = vsel %vm782, %v783, %v694
      %v785 = vshrl.u32 %v784, 4
      %v786 = vand.u32 %v784, 15
      %v787 = vsub.s32 0, %v786
      %v788 = vsel %vm782, %v787, %v786
      %vm789 = vcmp.lt.s32.totalorder %v695, 0
      %v790 = vsub.s32 0, %v695
      %v791 = vsel %vm789, %v790, %v695
      %v792 = vshrl.u32 %v791, 4
      %v793 = vand.u32 %v791, 15
      %v794 = vsub.s32 0, %v793
      %v795 = vsel %vm789, %v794, %v793
      %vm796 = vcmp.lt.s32.totalorder %v696, 0
      %v797 = vsub.s32 0, %v696
      %v798 = vsel %vm796, %v797, %v696
      %v799 = vshrl.u32 %v798, 4
      %v800 = vand.u32 %v798, 15
      %v801 = vsub.s32 0, %v800
      %v802 = vsel %vm796, %v801, %v800
      %vm803 = vcmp.lt.s32.totalorder %v697, 0
      %v804 = vsub.s32 0, %v697
      %v805 = vsel %vm803, %v804, %v697
      %v806 = vshrl.u32 %v805, 4
      %v807 = vand.u32 %v805, 15
      %v808 = vsub.s32 0, %v807
      %v809 = vsel %vm803, %v808, %v807
      %vm810 = vcmp.ne.s32.totalorder %v704, 0
      %vm811 = vcmp.ne.s32.totalorder %v711, 0
      %vm812 = vcmp.ne.s32.totalorder %v718, 0
      %vm813 = vcmp.ne.s32.totalorder %v725, 0
      %vm814 = vcmp.ne.s32.totalorder %v732, 0
      %vm815 = vcmp.ne.s32.totalorder %v739, 0
      %vm816 = vcmp.ne.s32.totalorder %v746, 0
      %vm817 = vcmp.ne.s32.totalorder %v753, 0
      %vm818 = vcmp.ne.s32.totalorder %v760, 0
      %vm819 = vcmp.ne.s32.totalorder %v767, 0
      %vm820 = vcmp.ne.s32.totalorder %v774, 0
      %vm821 = vcmp.ne.s32.totalorder %v781, 0
      %vm822 = vcmp.ne.s32.totalorder %v788, 0
      %vm823 = vcmp.ne.s32.totalorder %v795, 0
      %vm824 = vcmp.ne.s32.totalorder %v802, 0
      %vm825 = vcmp.ne.s32.totalorder %v809, 0
      %vm826 = vcmp.lt.s32.totalorder %v704, 0
      %vm827 = vcmp.lt.s32.totalorder %v711, 0
      %vm828 = vcmp.lt.s32.totalorder %v718, 0
      %vm829 = vcmp.lt.s32.totalorder %v725, 0
      %vm830 = vcmp.lt.s32.totalorder %v732, 0
      %vm831 = vcmp.lt.s32.totalorder %v739, 0
      %vm832 = vcmp.lt.s32.totalorder %v746, 0
      %vm833 = vcmp.lt.s32.totalorder %v753, 0
      %vm834 = vcmp.lt.s32.totalorder %v760, 0
      %vm835 = vcmp.lt.s32.totalorder %v767, 0
      %vm836 = vcmp.lt.s32.totalorder %v774, 0
      %vm837 = vcmp.lt.s32.totalorder %v781, 0
      %vm838 = vcmp.lt.s32.totalorder %v788, 0
      %vm839 = vcmp.lt.s32.totalorder %v795, 0
      %vm840 = vcmp.lt.s32.totalorder %v802, 0
      %vm841 = vcmp.lt.s32.totalorder %v809, 0
      %vm842 = vmand %vm826, %vm810
      %vm843 = vmand %vm827, %vm811
      %vm844 = vmand %vm828, %vm812
      %vm845 = vmand %vm829, %vm813
      %vm846 = vmand %vm830, %vm814
      %vm847 = vmand %vm831, %vm815
      %vm848 = vmand %vm832, %vm816
      %vm849 = vmand %vm833, %vm817
      %vm850 = vmand %vm834, %vm818
      %vm851 = vmand %vm835, %vm819
      %vm852 = vmand %vm836, %vm820
      %vm853 = vmand %vm837, %vm821
      %vm854 = vmand %vm838, %vm822
      %vm855 = vmand %vm839, %vm823
      %vm856 = vmand %vm840, %vm824
      %vm857 = vmand %vm841, %vm825
      %v858 = vadd.s32 %v704, 16
      %v859 = vadd.s32 %v711, 16
      %v860 = vadd.s32 %v718, 16
      %v861 = vadd.s32 %v725, 16
      %v862 = vadd.s32 %v732, 16
      %v863 = vadd.s32 %v739, 16
      %v864 = vadd.s32 %v746, 16
      %v865 = vadd.s32 %v753, 16
      %v866 = vadd.s32 %v760, 16
      %v867 = vadd.s32 %v767, 16
      %v868 = vadd.s32 %v774, 16
      %v869 = vadd.s32 %v781, 16
      %v870 = vadd.s32 %v788, 16
      %v871 = vadd.s32 %v795, 16
      %v872 = vadd.s32 %v802, 16
      %v873 = vadd.s32 %v809, 16
      %v874 = vsel %vm842, %v858, %v704
      %v875 = vsel %vm843, %v859, %v711
      %v876 = vsel %vm844, %v860, %v718
      %v877 = vsel %vm845, %v861, %v725
      %v878 = vsel %vm846, %v862, %v732
      %v879 = vsel %vm847, %v863, %v739
      %v880 = vsel %vm848, %v864, %v746
      %v881 = vsel %vm849, %v865, %v753
      %v882 = vsel %vm850, %v866, %v760
      %v883 = vsel %vm851, %v867, %v767
      %v884 = vsel %vm852, %v868, %v774
      %v885 = vsel %vm853, %v869, %v781
      %v886 = vsel %vm854, %v870, %v788
      %v887 = vsel %vm855, %v871, %v795
      %v888 = vsel %vm856, %v872, %v802
      %v889 = vsel %vm857, %v873, %v809
      %vm890 = vcmp.ge.s32.totalorder %v874, 1
      %vm891 = vcmp.ge.s32.totalorder %v875, 1
      %vm892 = vcmp.ge.s32.totalorder %v876, 1
      %vm893 = vcmp.ge.s32.totalorder %v877, 1
      %vm894 = vcmp.ge.s32.totalorder %v878, 1
      %vm895 = vcmp.ge.s32.totalorder %v879, 1
      %vm896 = vcmp.ge.s32.totalorder %v880, 1
      %vm897 = vcmp.ge.s32.totalorder %v881, 1
      %vm898 = vcmp.ge.s32.totalorder %v882, 1
      %vm899 = vcmp.ge.s32.totalorder %v883, 1
      %vm900 = vcmp.ge.s32.totalorder %v884, 1
      %vm901 = vcmp.ge.s32.totalorder %v885, 1
      %vm902 = vcmp.ge.s32.totalorder %v886, 1
      %vm903 = vcmp.ge.s32.totalorder %v887, 1
      %vm904 = vcmp.ge.s32.totalorder %v888, 1
      %vm905 = vcmp.ge.s32.totalorder %v889, 1
      %v906 = vsel %vm890, 1, 0
      %v907 = vsel %vm891, 1, 0
      %v908 = vsel %vm892, 1, 0
      %v909 = vsel %vm893, 1, 0
      %v910 = vsel %vm894, 1, 0
      %v911 = vsel %vm895, 1, 0
      %v912 = vsel %vm896, 1, 0
      %v913 = vsel %vm897, 1, 0
      %v914 = vsel %vm898, 1, 0
      %v915 = vsel %vm899, 1, 0
      %v916 = vsel %vm900, 1, 0
      %v917 = vsel %vm901, 1, 0
      %v918 = vsel %vm902, 1, 0
      %v919 = vsel %vm903, 1, 0
      %v920 = vsel %vm904, 1, 0
      %v921 = vsel %vm905, 1, 0
      %v922 = vcvt.s32.f32 %v906
      %v923 = vcvt.s32.f32 %v907
      %v924 = vcvt.s32.f32 %v908
      %v925 = vcvt.s32.f32 %v909
      %v926 = vcvt.s32.f32 %v910
      %v927 = vcvt.s32.f32 %v911
      %v928 = vcvt.s32.f32 %v912
      %v929 = vcvt.s32.f32 %v913
      %v930 = vcvt.s32.f32 %v914
      %v931 = vcvt.s32.f32 %v915
      %v932 = vcvt.s32.f32 %v916
      %v933 = vcvt.s32.f32 %v917
      %v934 = vcvt.s32.f32 %v918
      %v935 = vcvt.s32.f32 %v919
      %v936 = vcvt.s32.f32 %v920
      %v937 = vcvt.s32.f32 %v921
      %vm938 = vcmp.le.s32.totalorder %v874, 14
      %vm939 = vcmp.le.s32.totalorder %v875, 14
      %vm940 = vcmp.le.s32.totalorder %v876, 14
      %vm941 = vcmp.le.s32.totalorder %v877, 14
      %vm942 = vcmp.le.s32.totalorder %v878, 14
      %vm943 = vcmp.le.s32.totalorder %v879, 14
      %vm944 = vcmp.le.s32.totalorder %v880, 14
      %vm945 = vcmp.le.s32.totalorder %v881, 14
      %vm946 = vcmp.le.s32.totalorder %v882, 14
      %vm947 = vcmp.le.s32.totalorder %v883, 14
      %vm948 = vcmp.le.s32.totalorder %v884, 14
      %vm949 = vcmp.le.s32.totalorder %v885, 14
      %vm950 = vcmp.le.s32.totalorder %v886, 14
      %vm951 = vcmp.le.s32.totalorder %v887, 14
      %vm952 = vcmp.le.s32.totalorder %v888, 14
      %vm953 = vcmp.le.s32.totalorder %v889, 14
      %v954 = vsel %vm938, 1, 0
      %v955 = vsel %vm939, 1, 0
      %v956 = vsel %vm940, 1, 0
      %v957 = vsel %vm941, 1, 0
      %v958 = vsel %vm942, 1, 0
      %v959 = vsel %vm943, 1, 0
      %v960 = vsel %vm944, 1, 0
      %v961 = vsel %vm945, 1, 0
      %v962 = vsel %vm946, 1, 0
      %v963 = vsel %vm947, 1, 0
      %v964 = vsel %vm948, 1, 0
      %v965 = vsel %vm949, 1, 0
      %v966 = vsel %vm950, 1, 0
      %v967 = vsel %vm951, 1, 0
      %v968 = vsel %vm952, 1, 0
      %v969 = vsel %vm953, 1, 0
      %v970 = vcvt.s32.f32 %v954
      %v971 = vcvt.s32.f32 %v955
      %v972 = vcvt.s32.f32 %v956
      %v973 = vcvt.s32.f32 %v957
      %v974 = vcvt.s32.f32 %v958
      %v975 = vcvt.s32.f32 %v959
      %v976 = vcvt.s32.f32 %v960
      %v977 = vcvt.s32.f32 %v961
      %v978 = vcvt.s32.f32 %v962
      %v979 = vcvt.s32.f32 %v963
      %v980 = vcvt.s32.f32 %v964
      %v981 = vcvt.s32.f32 %v965
      %v982 = vcvt.s32.f32 %v966
      %v983 = vcvt.s32.f32 %v967
      %v984 = vcvt.s32.f32 %v968
      %v985 = vcvt.s32.f32 %v969
      loop: start=0, step=1, limit=2
      $region56: #{bottleneck.1} parent=47 // loop_pre_header
        _
      $region57: #{bottleneck.1} parent=47 // loop_header
        %s987 = sphi 0, %s991
        %p988 = scmp.ge.s32.totalorder %s987, 2
      $region58: #{bottleneck.1} parent=47 // loop_header_branch
        %990 = sbr.rel (%p988) target = $region62
      $region59: #{bottleneck.1} parent=47 // loop_body
        %s992 = smul.u32 %s987, 128
        %s993 = sadd.s32 %s992, 7
        %s994 = scalar_lea.vmem [#allocation2], %s993
        %v995 = vld [vmem:[%s994] sm:$0xff]
        %v996 = vld [vmem:[%s994 + $0x8] sm:$0xff]
        %v997 = vld [vmem:[%s994 + $0x10] sm:$0xff]
        %v998 = vld [vmem:[%s994 + $0x18] sm:$0xff]
        %v999 = vld [vmem:[%s994 + $0x20] sm:$0xff]
        %v1000 = vld [vmem:[%s994 + $0x28] sm:$0xff]
        %v1001 = vld [vmem:[%s994 + $0x30] sm:$0xff]
        %v1002 = vld [vmem:[%s994 + $0x38] sm:$0xff]
        %v1003 = vld [vmem:[%s994 + $0x40] sm:$0xff]
        %v1004 = vld [vmem:[%s994 + $0x48] sm:$0xff]
        %v1005 = vld [vmem:[%s994 + $0x50] sm:$0xff]
        %v1006 = vld [vmem:[%s994 + $0x58] sm:$0xff]
        %v1007 = vld [vmem:[%s994 + $0x60] sm:$0xff]
        %v1008 = vld [vmem:[%s994 + $0x68] sm:$0xff]
        %v1009 = vld [vmem:[%s994 + $0x70] sm:$0xff]
        %v1010 = vld [vmem:[%s994 + $0x78] sm:$0xff]
        %v1011 = vld [vmem:[%s994 + $0x80] sm:$0xff]
        %v1012 = vld [vmem:[%s994 + $0x88] sm:$0xff]
        %v1013 = vld [vmem:[%s994 + $0x90] sm:$0xff]
        %v1014 = vld [vmem:[%s994 + $0x98] sm:$0xff]
        %v1015 = vld [vmem:[%s994 + $0xa0] sm:$0x3]
        %v1016 = vld [vmem:[%s4] sm:$0xf]
        %v1018 = vsel %vm279, %v995, 0
        %v1021 = vsel %vm279, %v996, 0
        %v1024 = vsel %vm279, %v997, 0
        %v1027 = vsel %vm279, %v998, 0
        %v1030 = vsel %vm279, %v999, 0
        %v1033 = vsel %vm279, %v1000, 0
        %v1036 = vsel %vm279, %v1001, 0
        %v1039 = vsel %vm279, %v1002, 0
        %v1042 = vsel %vm279, %v1003, 0
        %v1045 = vsel %vm279, %v1004, 0
        %v1048 = vsel %vm279, %v1005, 0
        %v1051 = vsel %vm279, %v1006, 0
        %v1054 = vsel %vm279, %v1007, 0
        %v1057 = vsel %vm279, %v1008, 0
        %v1060 = vsel %vm279, %v1009, 0
        %v1063 = vsel %vm279, %v1010, 0
        %v1066 = vsel %vm279, %v1011, 0
        %v1069 = vsel %vm279, %v1012, 0
        %v1072 = vsel %vm279, %v1013, 0
        %v1075 = vsel %vm279, %v1014, 0
        %v1078 = vsel %vm279, %v1015, 0
        %vm1080 = vcmask 1043456
        %v1082 = vsel %vm1080, %v1016, 0
        %1084 = vmatprep.subr.mxu0 0.0
        %1085 = vmatpush1.msra.mxu0 %v1082
        %1086 = vmatprep.subr.mxu0 0.0
        %1087 = vmatpush1.msra.mxu0 0.0
        %1088 = vmatprep.subr.mxu0 0.0
        %1089 = vmatpush1.msra.mxu0 0.0
        %1090 = vmatprep.subr.mxu0 0.0
        %1091 = vmatpush1.msra.mxu0 0.0
        %1092 = vmatprep.subr.mxu0 0.0
        %1093 = vmatpush1.msra.mxu0 0.0
        %1094 = vmatprep.subr.mxu0 0.0
        %1095 = vmatpush1.msra.mxu0 0.0
        %1096 = vmatprep.subr.mxu0 0.0
        %1097 = vmatpush1.msra.mxu0 0.0
        %1098 = vmatprep.subr.mxu0 0.0
        %1099 = vmatpush1.msra.mxu0 0.0
        %1100 = vmatprep.subr.mxu0 0.0
        %1101 = vmatpush1.msra.mxu0 0.0
        %1102 = vmatprep.subr.mxu0 0.0
        %1103 = vmatpush1.msra.mxu0 0.0
        %1104 = vmatprep.subr.mxu0 0.0
        %1105 = vmatpush1.msra.mxu0 0.0
        %1106 = vmatprep.subr.mxu0 0.0
        %1107 = vmatpush1.msra.mxu0 0.0
        %1108 = vmatprep.subr.mxu0 0.0
        %1109 = vmatpush1.msra.mxu0 0.0
        %1110 = vmatprep.subr.mxu0 0.0
        %1111 = vmatpush1.msra.mxu0 0.0
        %1112 = vmatprep.subr.mxu0 0.0
        %1113 = vmatpush1.msra.mxu0 0.0
        %1114 = vmatprep.subr.mxu0 0.0
        %1115 = vmatpush1.msra.mxu0 0.0
        %1116 = vmatprep.subr.mxu0 0.0
        %1117 = vmatpush1.msra.mxu0 0.0
        %1118 = vmatprep.subr.mxu0 0.0
        %1119 = vmatpush1.msra.mxu0 0.0
        %1120 = vmatprep.subr.mxu0 0.0
        %1121 = vmatpush1.msra.mxu0 0.0
        %1122 = vmatprep.subr.mxu0 0.0
        %1123 = vmatpush1.msra.mxu0 0.0
        %1124 = vmatprep.subr.mxu0 0.0
        %1125 = vmatpush1.msra.mxu0 0.0
        %1126 = vmatprep.subr.mxu0 0.0
        %1127 = vmatpush1.msra.mxu0 0.0
        %1128 = vmatprep.subr.mxu0 0.0
        %1129 = vmatpush1.msra.mxu0 0.0
        %1130 = vmatprep.subr.mxu0 0.0
        %1131 = vmatpush1.msra.mxu0 0.0
        %1132 = vmatprep.subr.mxu0 0.0
        %1133 = vmatpush1.msra.mxu0 0.0
        %1134 = vmatprep.subr.mxu0 0.0
        %1135 = vmatpush1.msra.mxu0 0.0
        %1136 = vmatprep.subr.mxu0 0.0
        %1137 = vmatpush1.msra.mxu0 0.0
        %1138 = vmatprep.subr.mxu0 0.0
        %1139 = vmatpush1.msra.mxu0 0.0
        %1140 = vmatprep.subr.mxu0 0.0
        %1141 = vmatpush1.msra.mxu0 0.0
        %1142 = vmatprep.subr.mxu0 0.0
        %1143 = vmatpush1.msra.mxu0 0.0
        %1144 = vmatprep.subr.mxu0 0.0
        %1145 = vmatpush1.msra.mxu0 0.0
        %1146 = vmatprep.subr.mxu0 0.0
        %1147 = vmatpush1.msra.mxu0 0.0
        %1148 = vmatprep.mubr.f32.mxu0 0.0
        %1149 = vmatmul.mubr.f32.gmra.mrb[0].mxu0 %v1018
        %v1150 = vpop.f32.mrb[0].mxu0
        %v1151 = vadd.f32 0.0, %v1150
        %v1152 = vpop.f32.mrb[0].mxu0
        %1153 = vmatprep.mubr.f32.mxu0 0.0
        %1154 = vmatmul.mubr.f32.gmra.mrb[0].mxu0 %v1021
        %v1155 = vpop.f32.mrb[0].mxu0
        %v1156 = vadd.f32 0.0, %v1155
        %v1157 = vpop.f32.mrb[0].mxu0
        %1158 = vmatprep.mubr.f32.mxu0 0.0
        %1159 = vmatmul.mubr.f32.gmra.mrb[0].mxu0 %v1024
        %v1160 = vpop.f32.mrb[0].mxu0
        %v1161 = vadd.f32 0.0, %v1160
        %v1162 = vpop.f32.mrb[0].mxu0
        %1163 = vmatprep.mubr.f32.mxu0 0.0
        %1164 = vmatmul.mubr.f32.gmra.mrb[0].mxu0 %v1027
        %v1165 = vpop.f32.mrb[0].mxu0
        %v1166 = vadd.f32 0.0, %v1165
        %v1167 = vpop.f32.mrb[0].mxu0
        %1168 = vmatprep.mubr.f32.mxu0 0.0
        %1169 = vmatmul.mubr.f32.gmra.mrb[0].mxu0 %v1030
        %v1170 = vpop.f32.mrb[0].mxu0
        %v1171 = vadd.f32 0.0, %v1170
        %v1172 = vpop.f32.mrb[0].mxu0
        %1173 = vmatprep.mubr.f32.mxu0 0.0
        %1174 = vmatmul.mubr.f32.gmra.mrb[0].mxu0 %v1033
        %v1175 = vpop.f32.mrb[0].mxu0
        %v1176 = vadd.f32 0.0, %v1175
        %v1177 = vpop.f32.mrb[0].mxu0
        %1178 = vmatprep.mubr.f32.mxu0 0.0
        %1179 = vmatmul.mubr.f32.gmra.mrb[0].mxu0 %v1036
        %v1180 = vpop.f32.mrb[0].mxu0
        %v1181 = vadd.f32 0.0, %v1180
        %v1182 = vpop.f32.mrb[0].mxu0
        %1183 = vmatprep.mubr.f32.mxu0 0.0
        %1184 = vmatmul.mubr.f32.gmra.mrb[0].mxu0 %v1039
        %v1185 = vpop.f32.mrb[0].mxu0
        %v1186 = vadd.f32 0.0, %v1185
        %v1187 = vpop.f32.mrb[0].mxu0
        %1188 = vmatprep.mubr.f32.mxu0 0.0
        %1189 = vmatmul.mubr.f32.gmra.mrb[0].mxu0 %v1042
        %v1190 = vpop.f32.mrb[0].mxu0
        %v1191 = vadd.f32 0.0, %v1190
        %v1192 = vpop.f32.mrb[0].mxu0
        %1193 = vmatprep.mubr.f32.mxu0 0.0
        %1194 = vmatmul.mubr.f32.gmra.mrb[0].mxu0 %v1045
        %v1195 = vpop.f32.mrb[0].mxu0
        %v1196 = vadd.f32 0.0, %v1195
        %v1197 = vpop.f32.mrb[0].mxu0
        %1198 = vmatprep.mubr.f32.mxu0 0.0
        %1199 = vmatmul.mubr.f32.gmra.mrb[0].mxu0 %v1048
        %v1200 = vpop.f32.mrb[0].mxu0
        %v1201 = vadd.f32 0.0, %v1200
        %v1202 = vpop.f32.mrb[0].mxu0
        %1203 = vmatprep.mubr.f32.mxu0 0.0
        %1204 = vmatmul.mubr.f32.gmra.mrb[0].mxu0 %v1051
        %v1205 = vpop.f32.mrb[0].mxu0
        %v1206 = vadd.f32 0.0, %v1205
        %v1207 = vpop.f32.mrb[0].mxu0
        %1208 = vmatprep.mubr.f32.mxu0 0.0
        %1209 = vmatmul.mubr.f32.gmra.mrb[0].mxu0 %v1054
        %v1210 = vpop.f32.mrb[0].mxu0
        %v1211 = vadd.f32 0.0, %v1210
        %v1212 = vpop.f32.mrb[0].mxu0
        %1213 = vmatprep.mubr.f32.mxu0 0.0
        %1214 = vmatmul.mubr.f32.gmra.mrb[0].mxu0 %v1057
        %v1215 = vpop.f32.mrb[0].mxu0
        %v1216 = vadd.f32 0.0, %v1215
        %v1217 = vpop.f32.mrb[0].mxu0
        %1218 = vmatprep.mubr.f32.mxu0 0.0
        %1219 = vmatmul.mubr.f32.gmra.mrb[0].mxu0 %v1060
        %v1220 = vpop.f32.mrb[0].mxu0
        %v1221 = vadd.f32 0.0, %v1220
        %v1222 = vpop.f32.mrb[0].mxu0
        %1223 = vmatprep.mubr.f32.mxu0 0.0
        %1224 = vmatmul.mubr.f32.gmra.mrb[0].mxu0 %v1063
        %v1225 = vpop.f32.mrb[0].mxu0
        %v1226 = vadd.f32 0.0, %v1225
        %v1227 = vpop.f32.mrb[0].mxu0
        %1228 = vmatprep.mubr.f32.mxu0 0.0
        %1229 = vmatmul.mubr.f32.gmra.mrb[0].mxu0 %v1066
        %v1230 = vpop.f32.mrb[0].mxu0
        %v1231 = vadd.f32 0.0, %v1230
        %v1232 = vpop.f32.mrb[0].mxu0
        %1233 = vmatprep.mubr.f32.mxu0 0.0
        %1234 = vmatmul.mubr.f32.gmra.mrb[0].mxu0 %v1069
        %v1235 = vpop.f32.mrb[0].mxu0
        %v1236 = vadd.f32 0.0, %v1235
        %v1237 = vpop.f32.mrb[0].mxu0
        %1238 = vmatprep.mubr.f32.mxu0 0.0
        %1239 = vmatmul.mubr.f32.gmra.mrb[0].mxu0 %v1072
        %v1240 = vpop.f32.mrb[0].mxu0
        %v1241 = vadd.f32 0.0, %v1240
        %v1242 = vpop.f32.mrb[0].mxu0
        %1243 = vmatprep.mubr.f32.mxu0 0.0
        %1244 = vmatmul.mubr.f32.gmra.mrb[0].mxu0 %v1075
        %v1245 = vpop.f32.mrb[0].mxu0
        %v1246 = vadd.f32 0.0, %v1245
        %v1247 = vpop.f32.mrb[0].mxu0
        %1248 = vmatprep.mubr.f32.mxu0 0.0
        %1249 = vmatmul.mubr.f32.gmra.mrb[0].mxu0 %v1078
        %v1250 = vpop.f32.mrb[0].mxu0
        %v1251 = vadd.f32 0.0, %v1250
        %v1252 = vpop.f32.mrb[0].mxu0
        %1253 = vdwg.mxu0
        %v1254 = vmul.f32 %v1151, %v922
        %v1255 = vmul.f32 %v1156, %v923
        %v1256 = vmul.f32 %v1161, %v924
        %v1257 = vmul.f32 %v1166, %v925
        %v1258 = vmul.f32 %v1171, %v926
        %v1259 = vmul.f32 %v1176, %v927
        %v1260 = vmul.f32 %v1181, %v928
        %v1261 = vmul.f32 %v1186, %v929
        %v1262 = vmul.f32 %v1191, %v930
        %v1263 = vmul.f32 %v1196, %v931
        %v1264 = vmul.f32 %v1201, %v932
        %v1265 = vmul.f32 %v1206, %v933
        %v1266 = vmul.f32 %v1211, %v934
        %v1267 = vmul.f32 %v1216, %v935
        %v1268 = vmul.f32 %v1221, %v936
        %v1269 = vmul.f32 %v1226, %v937
        %v1270 = vadd.f32 %v1254, 0.0
        %v1271 = vadd.f32 %v1255, 0.0
        %v1272 = vadd.f32 %v1256, 0.0
        %v1273 = vadd.f32 %v1257, 0.0
        %v1274 = vadd.f32 %v1258, 0.0
        %v1275 = vadd.f32 %v1259, 0.0
        %v1276 = vadd.f32 %v1260, 0.0
        %v1277 = vadd.f32 %v1261, 0.0
        %v1278 = vadd.f32 %v1262, 0.0
        %v1279 = vadd.f32 %v1263, 0.0
        %v1280 = vadd.f32 %v1264, 0.0
        %v1281 = vadd.f32 %v1265, 0.0
        %v1282 = vadd.f32 %v1266, 0.0
        %v1283 = vadd.f32 %v1267, 0.0
        %v1284 = vadd.f32 %v1268, 0.0
        %v1285 = vadd.f32 %v1269, 0.0
        %vm1303 = vcmask 1046528
        %v1304 = vrot.slane %v1151, 1
        %v1305 = vrot.slane %v1156, 1
        %v1306 = vsel %vm1303, %v1304, %v1305
        %v1307 = vrot.slane %v1161, 1
        %v1308 = vsel %vm1303, %v1305, %v1307
        %v1309 = vrot.slane %v1166, 1
        %v1310 = vsel %vm1303, %v1307, %v1309
        %v1311 = vrot.slane %v1171, 1
        %v1312 = vsel %vm1303, %v1309, %v1311
        %v1313 = vrot.slane %v1176, 1
        %v1314 = vsel %vm1303, %v1311, %v1313
        %v1315 = vrot.slane %v1181, 1
        %v1316 = vsel %vm1303, %v1313, %v1315
        %v1317 = vrot.slane %v1186, 1
        %v1318 = vsel %vm1303, %v1315, %v1317
        %v1319 = vrot.slane %v1191, 1
        %v1320 = vsel %vm1303, %v1317, %v1319
        %v1321 = vrot.slane %v1196, 1
        %v1322 = vsel %vm1303, %v1319, %v1321
        %v1323 = vrot.slane %v1201, 1
        %v1324 = vsel %vm1303, %v1321, %v1323
        %v1325 = vrot.slane %v1206, 1
        %v1326 = vsel %vm1303, %v1323, %v1325
        %v1327 = vrot.slane %v1211, 1
        %v1328 = vsel %vm1303, %v1325, %v1327
        %v1329 = vrot.slane %v1216, 1
        %v1330 = vsel %vm1303, %v1327, %v1329
        %v1331 = vrot.slane %v1221, 1
        %v1332 = vsel %vm1303, %v1329, %v1331
        %v1333 = vrot.slane %v1226, 1
        %v1334 = vsel %vm1303, %v1331, %v1333
        %v1335 = vrot.slane %v1231, 1
        %v1336 = vsel %vm1303, %v1333, %v1335
        %1337 = vrot.lane.b32.xlu0 %v1306, 120
        %v1338 = vpop.permute.xlu0 %1337
        %1339 = vrot.lane.b32.xlu0 %v1308, 120
        %v1340 = vpop.permute.xlu0 %1339
        %1341 = vrot.lane.b32.xlu0 %v1310, 120
        %v1342 = vpop.permute.xlu0 %1341
        %1343 = vrot.lane.b32.xlu0 %v1312, 120
        %v1344 = vpop.permute.xlu0 %1343
        %1345 = vrot.lane.b32.xlu0 %v1314, 120
        %v1346 = vpop.permute.xlu0 %1345
        %1347 = vrot.lane.b32.xlu0 %v1316, 120
        %v1348 = vpop.permute.xlu0 %1347
        %1349 = vrot.lane.b32.xlu0 %v1318, 120
        %v1350 = vpop.permute.xlu0 %1349
        %1351 = vrot.lane.b32.xlu0 %v1320, 120
        %v1352 = vpop.permute.xlu0 %1351
        %1353 = vrot.lane.b32.xlu0 %v1322, 120
        %v1354 = vpop.permute.xlu0 %1353
        %1355 = vrot.lane.b32.xlu0 %v1324, 120
        %v1356 = vpop.permute.xlu0 %1355
        %1357 = vrot.lane.b32.xlu0 %v1326, 120
        %v1358 = vpop.permute.xlu0 %1357
        %1359 = vrot.lane.b32.xlu0 %v1328, 120
        %v1360 = vpop.permute.xlu0 %1359
        %1361 = vrot.lane.b32.xlu0 %v1330, 120
        %v1362 = vpop.permute.xlu0 %1361
        %1363 = vrot.lane.b32.xlu0 %v1332, 120
        %v1364 = vpop.permute.xlu0 %1363
        %1365 = vrot.lane.b32.xlu0 %v1334, 120
        %v1366 = vpop.permute.xlu0 %1365
        %1367 = vrot.lane.b32.xlu0 %v1336, 120
        %v1368 = vpop.permute.xlu0 %1367
        %v1385 = vadd.f32 %v1270, %v1338
        %v1386 = vadd.f32 %v1271, %v1340
        %v1387 = vadd.f32 %v1272, %v1342
        %v1388 = vadd.f32 %v1273, %v1344
        %v1389 = vadd.f32 %v1274, %v1346
        %v1390 = vadd.f32 %v1275, %v1348
        %v1391 = vadd.f32 %v1276, %v1350
        %v1392 = vadd.f32 %v1277, %v1352
        %v1393 = vadd.f32 %v1278, %v1354
        %v1394 = vadd.f32 %v1279, %v1356
        %v1395 = vadd.f32 %v1280, %v1358
        %v1396 = vadd.f32 %v1281, %v1360
        %v1397 = vadd.f32 %v1282, %v1362
        %v1398 = vadd.f32 %v1283, %v1364
        %v1399 = vadd.f32 %v1284, %v1366
        %v1400 = vadd.f32 %v1285, %v1368
        %vm1417 = vcmask 1041408
        %v1418 = vrot.slane %v970, 6
        %v1419 = vrot.slane %v971, 6
        %v1420 = vsel %vm1417, %v1418, %v1419
        %v1421 = vrot.slane %v972, 6
        %v1422 = vsel %vm1417, %v1419, %v1421
        %v1423 = vrot.slane %v973, 6
        %v1424 = vsel %vm1417, %v1421, %v1423
        %v1425 = vrot.slane %v974, 6
        %v1426 = vsel %vm1417, %v1423, %v1425
        %v1427 = vrot.slane %v975, 6
        %v1428 = vsel %vm1417, %v1425, %v1427
        %v1429 = vrot.slane %v976, 6
        %v1430 = vsel %vm1417, %v1427, %v1429
        %v1431 = vrot.slane %v977, 6
        %v1432 = vsel %vm1417, %v1429, %v1431
        %v1433 = vrot.slane %v978, 6
        %v1434 = vsel %vm1417, %v1431, %v1433
        %v1435 = vrot.slane %v979, 6
        %v1436 = vsel %vm1417, %v1433, %v1435
        %v1437 = vrot.slane %v980, 6
        %v1438 = vsel %vm1417, %v1435, %v1437
        %v1439 = vrot.slane %v981, 6
        %v1440 = vsel %vm1417, %v1437, %v1439
        %v1441 = vrot.slane %v982, 6
        %v1442 = vsel %vm1417, %v1439, %v1441
        %v1443 = vrot.slane %v983, 6
        %v1444 = vsel %vm1417, %v1441, %v1443
        %v1445 = vrot.slane %v984, 6
        %v1446 = vsel %vm1417, %v1443, %v1445
        %v1447 = vrot.slane %v985, 6
        %v1448 = vsel %vm1417, %v1445, %v1447
        %v1466 = vmul.f32 %v1151, %v1418
        %v1467 = vmul.f32 %v1156, %v1420
        %v1468 = vmul.f32 %v1161, %v1422
        %v1469 = vmul.f32 %v1166, %v1424
        %v1470 = vmul.f32 %v1171, %v1426
        %v1471 = vmul.f32 %v1176, %v1428
        %v1472 = vmul.f32 %v1181, %v1430
        %v1473 = vmul.f32 %v1186, %v1432
        %v1474 = vmul.f32 %v1191, %v1434
        %v1475 = vmul.f32 %v1196, %v1436
        %v1476 = vmul.f32 %v1201, %v1438
        %v1477 = vmul.f32 %v1206, %v1440
        %v1478 = vmul.f32 %v1211, %v1442
        %v1479 = vmul.f32 %v1216, %v1444
        %v1480 = vmul.f32 %v1221, %v1446
        %v1481 = vmul.f32 %v1226, %v1448
        %v1482 = vmul.f32 %v1231, %v1447
        %vm1500 = vcmask 1045504
        %v1501 = vrot.slane %v1466, 2
        %v1502 = vrot.slane %v1467, 2
        %v1503 = vsel %vm1500, %v1501, %v1502
        %v1504 = vrot.slane %v1468, 2
        %v1505 = vsel %vm1500, %v1502, %v1504
        %v1506 = vrot.slane %v1469, 2
        %v1507 = vsel %vm1500, %v1504, %v1506
        %v1508 = vrot.slane %v1470, 2
        %v1509 = vsel %vm1500, %v1506, %v1508
        %v1510 = vrot.slane %v1471, 2
        %v1511 = vsel %vm1500, %v1508, %v1510
        %v1512 = vrot.slane %v1472, 2
        %v1513 = vsel %vm1500, %v1510, %v1512
        %v1514 = vrot.slane %v1473, 2
        %v1515 = vsel %vm1500, %v1512, %v1514
        %v1516 = vrot.slane %v1474, 2
        %v1517 = vsel %vm1500, %v1514, %v1516
        %v1518 = vrot.slane %v1475, 2
        %v1519 = vsel %vm1500, %v1516, %v1518
        %v1520 = vrot.slane %v1476, 2
        %v1521 = vsel %vm1500, %v1518, %v1520
        %v1522 = vrot.slane %v1477, 2
        %v1523 = vsel %vm1500, %v1520, %v1522
        %v1524 = vrot.slane %v1478, 2
        %v1525 = vsel %vm1500, %v1522, %v1524
        %v1526 = vrot.slane %v1479, 2
        %v1527 = vsel %vm1500, %v1524, %v1526
        %v1528 = vrot.slane %v1480, 2
        %v1529 = vsel %vm1500, %v1526, %v1528
        %v1530 = vrot.slane %v1481, 2
        %v1531 = vsel %vm1500, %v1528, %v1530
        %v1532 = vrot.slane %v1482, 2
        %v1533 = vsel %vm1500, %v1530, %v1532
        %1534 = vrot.lane.b32.xlu0 %v1503, 112
        %v1535 = vpop.permute.xlu0 %1534
        %1536 = vrot.lane.b32.xlu0 %v1505, 112
        %v1537 = vpop.permute.xlu0 %1536
        %1538 = vrot.lane.b32.xlu0 %v1507, 112
        %v1539 = vpop.permute.xlu0 %1538
        %1540 = vrot.lane.b32.xlu0 %v1509, 112
        %v1541 = vpop.permute.xlu0 %1540
        %1542 = vrot.lane.b32.xlu0 %v1511, 112
        %v1543 = vpop.permute.xlu0 %1542
        %1544 = vrot.lane.b32.xlu0 %v1513, 112
        %v1545 = vpop.permute.xlu0 %1544
        %1546 = vrot.lane.b32.xlu0 %v1515, 112
        %v1547 = vpop.permute.xlu0 %1546
        %1548 = vrot.lane.b32.xlu0 %v1517, 112
        %v1549 = vpop.permute.xlu0 %1548
        %1550 = vrot.lane.b32.xlu0 %v1519, 112
        %v1551 = vpop.permute.xlu0 %1550
        %1552 = vrot.lane.b32.xlu0 %v1521, 112
        %v1553 = vpop.permute.xlu0 %1552
        %1554 = vrot.lane.b32.xlu0 %v1523, 112
        %v1555 = vpop.permute.xlu0 %1554
        %1556 = vrot.lane.b32.xlu0 %v1525, 112
        %v1557 = vpop.permute.xlu0 %1556
        %1558 = vrot.lane.b32.xlu0 %v1527, 112
        %v1559 = vpop.permute.xlu0 %1558
        %1560 = vrot.lane.b32.xlu0 %v1529, 112
        %v1561 = vpop.permute.xlu0 %1560
        %1562 = vrot.lane.b32.xlu0 %v1531, 112
        %v1563 = vpop.permute.xlu0 %1562
        %1564 = vrot.lane.b32.xlu0 %v1533, 112
        %v1565 = vpop.permute.xlu0 %1564
        %v1582 = vadd.f32 %v1385, %v1535
        %v1583 = vadd.f32 %v1386, %v1537
        %v1584 = vadd.f32 %v1387, %v1539
        %v1585 = vadd.f32 %v1388, %v1541
        %v1586 = vadd.f32 %v1389, %v1543
        %v1587 = vadd.f32 %v1390, %v1545
        %v1588 = vadd.f32 %v1391, %v1547
        %v1589 = vadd.f32 %v1392, %v1549
        %v1590 = vadd.f32 %v1393, %v1551
        %v1591 = vadd.f32 %v1394, %v1553
        %v1592 = vadd.f32 %v1395, %v1555
        %v1593 = vadd.f32 %v1396, %v1557
        %v1594 = vadd.f32 %v1397, %v1559
        %v1595 = vadd.f32 %v1398, %v1561
        %v1596 = vadd.f32 %v1399, %v1563
        %v1597 = vadd.f32 %v1400, %v1565
        %v1598 = vmul.f32 %v1161, %v922
        %v1599 = vmul.f32 %v1166, %v923
        %v1600 = vmul.f32 %v1171, %v924
        %v1601 = vmul.f32 %v1176, %v925
        %v1602 = vmul.f32 %v1181, %v926
        %v1603 = vmul.f32 %v1186, %v927
        %v1604 = vmul.f32 %v1191, %v928
        %v1605 = vmul.f32 %v1196, %v929
        %v1606 = vmul.f32 %v1201, %v930
        %v1607 = vmul.f32 %v1206, %v931
        %v1608 = vmul.f32 %v1211, %v932
        %v1609 = vmul.f32 %v1216, %v933
        %v1610 = vmul.f32 %v1221, %v934
        %v1611 = vmul.f32 %v1226, %v935
        %v1612 = vmul.f32 %v1231, %v936
        %v1613 = vmul.f32 %v1236, %v937
        %1630 = vrot.lane.b32.xlu0 %v1598, 104
        %v1631 = vpop.permute.xlu0 %1630
        %1632 = vrot.lane.b32.xlu0 %v1599, 104
        %v1633 = vpop.permute.xlu0 %1632
        %1634 = vrot.lane.b32.xlu0 %v1600, 104
        %v1635 = vpop.permute.xlu0 %1634
        %1636 = vrot.lane.b32.xlu0 %v1601, 104
        %v1637 = vpop.permute.xlu0 %1636
        %1638 = vrot.lane.b32.xlu0 %v1602, 104
        %v1639 = vpop.permute.xlu0 %1638
        %1640 = vrot.lane.b32.xlu0 %v1603, 104
        %v1641 = vpop.permute.xlu0 %1640
        %1642 = vrot.lane.b32.xlu0 %v1604, 104
        %v1643 = vpop.permute.xlu0 %1642
        %1644 = vrot.lane.b32.xlu0 %v1605, 104
        %v1645 = vpop.permute.xlu0 %1644
        %1646 = vrot.lane.b32.xlu0 %v1606, 104
        %v1647 = vpop.permute.xlu0 %1646
        %1648 = vrot.lane.b32.xlu0 %v1607, 104
        %v1649 = vpop.permute.xlu0 %1648
        %1650 = vrot.lane.b32.xlu0 %v1608, 104
        %v1651 = vpop.permute.xlu0 %1650
        %1652 = vrot.lane.b32.xlu0 %v1609, 104
        %v1653 = vpop.permute.xlu0 %1652
        %1654 = vrot.lane.b32.xlu0 %v1610, 104
        %v1655 = vpop.permute.xlu0 %1654
        %1656 = vrot.lane.b32.xlu0 %v1611, 104
        %v1657 = vpop.permute.xlu0 %1656
        %1658 = vrot.lane.b32.xlu0 %v1612, 104
        %v1659 = vpop.permute.xlu0 %1658
        %1660 = vrot.lane.b32.xlu0 %v1613, 104
        %v1661 = vpop.permute.xlu0 %1660
        %v1678 = vadd.f32 %v1582, %v1631
        %v1679 = vadd.f32 %v1583, %v1633
        %v1680 = vadd.f32 %v1584, %v1635
        %v1681 = vadd.f32 %v1585, %v1637
        %v1682 = vadd.f32 %v1586, %v1639
        %v1683 = vadd.f32 %v1587, %v1641
        %v1684 = vadd.f32 %v1588, %v1643
        %v1685 = vadd.f32 %v1589, %v1645
        %v1686 = vadd.f32 %v1590, %v1647
        %v1687 = vadd.f32 %v1591, %v1649
        %v1688 = vadd.f32 %v1592, %v1651
        %v1689 = vadd.f32 %v1593, %v1653
        %v1690 = vadd.f32 %v1594, %v1655
        %v1691 = vadd.f32 %v1595, %v1657
        %v1692 = vadd.f32 %v1596, %v1659
        %v1693 = vadd.f32 %v1597, %v1661
        %v1696 = vrot.slane %v1236, 1
        %v1697 = vsel %vm1303, %v1335, %v1696
        %v1698 = vrot.slane %v1241, 1
        %v1699 = vsel %vm1303, %v1696, %v1698
        %1700 = vrot.lane.b32.xlu0 %v1310, 96
        %v1701 = vpop.permute.xlu0 %1700
        %1702 = vrot.lane.b32.xlu0 %v1312, 96
        %v1703 = vpop.permute.xlu0 %1702
        %1704 = vrot.lane.b32.xlu0 %v1314, 96
        %v1705 = vpop.permute.xlu0 %1704
        %1706 = vrot.lane.b32.xlu0 %v1316, 96
        %v1707 = vpop.permute.xlu0 %1706
        %1708 = vrot.lane.b32.xlu0 %v1318, 96
        %v1709 = vpop.permute.xlu0 %1708
        %1710 = vrot.lane.b32.xlu0 %v1320, 96
        %v1711 = vpop.permute.xlu0 %1710
        %1712 = vrot.lane.b32.xlu0 %v1322, 96
        %v1713 = vpop.permute.xlu0 %1712
        %1714 = vrot.lane.b32.xlu0 %v1324, 96
        %v1715 = vpop.permute.xlu0 %1714
        %1716 = vrot.lane.b32.xlu0 %v1326, 96
        %v1717 = vpop.permute.xlu0 %1716
        %1718 = vrot.lane.b32.xlu0 %v1328, 96
        %v1719 = vpop.permute.xlu0 %1718
        %1720 = vrot.lane.b32.xlu0 %v1330, 96
        %v1721 = vpop.permute.xlu0 %1720
        %1722 = vrot.lane.b32.xlu0 %v1332, 96
        %v1723 = vpop.permute.xlu0 %1722
        %1724 = vrot.lane.b32.xlu0 %v1334, 96
        %v1725 = vpop.permute.xlu0 %1724
        %1726 = vrot.lane.b32.xlu0 %v1336, 96
        %v1727 = vpop.permute.xlu0 %1726
        %1728 = vrot.lane.b32.xlu0 %v1697, 96
        %v1729 = vpop.permute.xlu0 %1728
        %1730 = vrot.lane.b32.xlu0 %v1699, 96
        %v1731 = vpop.permute.xlu0 %1730
        %v1748 = vadd.f32 %v1678, %v1701
        %v1749 = vadd.f32 %v1679, %v1703
        %v1750 = vadd.f32 %v1680, %v1705
        %v1751 = vadd.f32 %v1681, %v1707
        %v1752 = vadd.f32 %v1682, %v1709
        %v1753 = vadd.f32 %v1683, %v1711
        %v1754 = vadd.f32 %v1684, %v1713
        %v1755 = vadd.f32 %v1685, %v1715
        %v1756 = vadd.f32 %v1686, %v1717
        %v1757 = vadd.f32 %v1687, %v1719
        %v1758 = vadd.f32 %v1688, %v1721
        %v1759 = vadd.f32 %v1689, %v1723
        %v1760 = vadd.f32 %v1690, %v1725
        %v1761 = vadd.f32 %v1691, %v1727
        %v1762 = vadd.f32 %v1692, %v1729
        %v1763 = vadd.f32 %v1693, %v1731
        %v1764 = vmul.f32 %v1161, %v1418
        %v1765 = vmul.f32 %v1166, %v1420
        %v1766 = vmul.f32 %v1171, %v1422
        %v1767 = vmul.f32 %v1176, %v1424
        %v1768 = vmul.f32 %v1181, %v1426
        %v1769 = vmul.f32 %v1186, %v1428
        %v1770 = vmul.f32 %v1191, %v1430
        %v1771 = vmul.f32 %v1196, %v1432
        %v1772 = vmul.f32 %v1201, %v1434
        %v1773 = vmul.f32 %v1206, %v1436
        %v1774 = vmul.f32 %v1211, %v1438
        %v1775 = vmul.f32 %v1216, %v1440
        %v1776 = vmul.f32 %v1221, %v1442
        %v1777 = vmul.f32 %v1226, %v1444
        %v1778 = vmul.f32 %v1231, %v1446
        %v1779 = vmul.f32 %v1236, %v1448
        %v1780 = vmul.f32 %v1241, %v1447
        %v1798 = vrot.slane %v1764, 2
        %v1799 = vrot.slane %v1765, 2
        %v1800 = vsel %vm1500, %v1798, %v1799
        %v1801 = vrot.slane %v1766, 2
        %v1802 = vsel %vm1500, %v1799, %v1801
        %v1803 = vrot.slane %v1767, 2
        %v1804 = vsel %vm1500, %v1801, %v1803
        %v1805 = vrot.slane %v1768, 2
        %v1806 = vsel %vm1500, %v1803, %v1805
        %v1807 = vrot.slane %v1769, 2
        %v1808 = vsel %vm1500, %v1805, %v1807
        %v1809 = vrot.slane %v1770, 2
        %v1810 = vsel %vm1500, %v1807, %v1809
        %v1811 = vrot.slane %v1771, 2
        %v1812 = vsel %vm1500, %v1809, %v1811
        %v1813 = vrot.slane %v1772, 2
        %v1814 = vsel %vm1500, %v1811, %v1813
        %v1815 = vrot.slane %v1773, 2
        %v1816 = vsel %vm1500, %v1813, %v1815
        %v1817 = vrot.slane %v1774, 2
        %v1818 = vsel %vm1500, %v1815, %v1817
        %v1819 = vrot.slane %v1775, 2
        %v1820 = vsel %vm1500, %v1817, %v1819
        %v1821 = vrot.slane %v1776, 2
        %v1822 = vsel %vm1500, %v1819, %v1821
        %v1823 = vrot.slane %v1777, 2
        %v1824 = vsel %vm1500, %v1821, %v1823
        %v1825 = vrot.slane %v1778, 2
        %v1826 = vsel %vm1500, %v1823, %v1825
        %v1827 = vrot.slane %v1779, 2
        %v1828 = vsel %vm1500, %v1825, %v1827
        %v1829 = vrot.slane %v1780, 2
        %v1830 = vsel %vm1500, %v1827, %v1829
        %1831 = vrot.lane.b32.xlu0 %v1800, 88
        %v1832 = vpop.permute.xlu0 %1831
        %1833 = vrot.lane.b32.xlu0 %v1802, 88
        %v1834 = vpop.permute.xlu0 %1833
        %1835 = vrot.lane.b32.xlu0 %v1804, 88
        %v1836 = vpop.permute.xlu0 %1835
        %1837 = vrot.lane.b32.xlu0 %v1806, 88
        %v1838 = vpop.permute.xlu0 %1837
        %1839 = vrot.lane.b32.xlu0 %v1808, 88
        %v1840 = vpop.permute.xlu0 %1839
        %1841 = vrot.lane.b32.xlu0 %v1810, 88
        %v1842 = vpop.permute.xlu0 %1841
        %1843 = vrot.lane.b32.xlu0 %v1812, 88
        %v1844 = vpop.permute.xlu0 %1843
        %1845 = vrot.lane.b32.xlu0 %v1814, 88
        %v1846 = vpop.permute.xlu0 %1845
        %1847 = vrot.lane.b32.xlu0 %v1816, 88
        %v1848 = vpop.permute.xlu0 %1847
        %1849 = vrot.lane.b32.xlu0 %v1818, 88
        %v1850 = vpop.permute.xlu0 %1849
        %1851 = vrot.lane.b32.xlu0 %v1820, 88
        %v1852 = vpop.permute.xlu0 %1851
        %1853 = vrot.lane.b32.xlu0 %v1822, 88
        %v1854 = vpop.permute.xlu0 %1853
        %1855 = vrot.lane.b32.xlu0 %v1824, 88
        %v1856 = vpop.permute.xlu0 %1855
        %1857 = vrot.lane.b32.xlu0 %v1826, 88
        %v1858 = vpop.permute.xlu0 %1857
        %1859 = vrot.lane.b32.xlu0 %v1828, 88
        %v1860 = vpop.permute.xlu0 %1859
        %1861 = vrot.lane.b32.xlu0 %v1830, 88
        %v1862 = vpop.permute.xlu0 %1861
        %v1879 = vadd.f32 %v1748, %v1832
        %v1880 = vadd.f32 %v1749, %v1834
        %v1881 = vadd.f32 %v1750, %v1836
        %v1882 = vadd.f32 %v1751, %v1838
        %v1883 = vadd.f32 %v1752, %v1840
        %v1884 = vadd.f32 %v1753, %v1842
        %v1885 = vadd.f32 %v1754, %v1844
        %v1886 = vadd.f32 %v1755, %v1846
        %v1887 = vadd.f32 %v1756, %v1848
        %v1888 = vadd.f32 %v1757, %v1850
        %v1889 = vadd.f32 %v1758, %v1852
        %v1890 = vadd.f32 %v1759, %v1854
        %v1891 = vadd.f32 %v1760, %v1856
        %v1892 = vadd.f32 %v1761, %v1858
        %v1893 = vadd.f32 %v1762, %v1860
        %v1894 = vadd.f32 %v1763, %v1862
        %v1895 = vmul.f32 %v1171, %v922
        %v1896 = vmul.f32 %v1176, %v923
        %v1897 = vmul.f32 %v1181, %v924
        %v1898 = vmul.f32 %v1186, %v925
        %v1899 = vmul.f32 %v1191, %v926
        %v1900 = vmul.f32 %v1196, %v927
        %v1901 = vmul.f32 %v1201, %v928
        %v1902 = vmul.f32 %v1206, %v929
        %v1903 = vmul.f32 %v1211, %v930
        %v1904 = vmul.f32 %v1216, %v931
        %v1905 = vmul.f32 %v1221, %v932
        %v1906 = vmul.f32 %v1226, %v933
        %v1907 = vmul.f32 %v1231, %v934
        %v1908 = vmul.f32 %v1236, %v935
        %v1909 = vmul.f32 %v1241, %v936
        %v1910 = vmul.f32 %v1246, %v937
        %1927 = vrot.lane.b32.xlu0 %v1895, 80
        %v1928 = vpop.permute.xlu0 %1927
        %1929 = vrot.lane.b32.xlu0 %v1896, 80
        %v1930 = vpop.permute.xlu0 %1929
        %1931 = vrot.lane.b32.xlu0 %v1897, 80
        %v1932 = vpop.permute.xlu0 %1931
        %1933 = vrot.lane.b32.xlu0 %v1898, 80
        %v1934 = vpop.permute.xlu0 %1933
        %1935 = vrot.lane.b32.xlu0 %v1899, 80
        %v1936 = vpop.permute.xlu0 %1935
        %1937 = vrot.lane.b32.xlu0 %v1900, 80
        %v1938 = vpop.permute.xlu0 %1937
        %1939 = vrot.lane.b32.xlu0 %v1901, 80
        %v1940 = vpop.permute.xlu0 %1939
        %1941 = vrot.lane.b32.xlu0 %v1902, 80
        %v1942 = vpop.permute.xlu0 %1941
        %1943 = vrot.lane.b32.xlu0 %v1903, 80
        %v1944 = vpop.permute.xlu0 %1943
        %1945 = vrot.lane.b32.xlu0 %v1904, 80
        %v1946 = vpop.permute.xlu0 %1945
        %1947 = vrot.lane.b32.xlu0 %v1905, 80
        %v1948 = vpop.permute.xlu0 %1947
        %1949 = vrot.lane.b32.xlu0 %v1906, 80
        %v1950 = vpop.permute.xlu0 %1949
        %1951 = vrot.lane.b32.xlu0 %v1907, 80
        %v1952 = vpop.permute.xlu0 %1951
        %1953 = vrot.lane.b32.xlu0 %v1908, 80
        %v1954 = vpop.permute.xlu0 %1953
        %1955 = vrot.lane.b32.xlu0 %v1909, 80
        %v1956 = vpop.permute.xlu0 %1955
        %1957 = vrot.lane.b32.xlu0 %v1910, 80
        %v1958 = vpop.permute.xlu0 %1957
        %v1975 = vadd.f32 %v1879, %v1928
        %v1976 = vadd.f32 %v1880, %v1930
        %v1977 = vadd.f32 %v1881, %v1932
        %v1978 = vadd.f32 %v1882, %v1934
        %v1979 = vadd.f32 %v1883, %v1936
        %v1980 = vadd.f32 %v1884, %v1938
        %v1981 = vadd.f32 %v1885, %v1940
        %v1982 = vadd.f32 %v1886, %v1942
        %v1983 = vadd.f32 %v1887, %v1944
        %v1984 = vadd.f32 %v1888, %v1946
        %v1985 = vadd.f32 %v1889, %v1948
        %v1986 = vadd.f32 %v1890, %v1950
        %v1987 = vadd.f32 %v1891, %v1952
        %v1988 = vadd.f32 %v1892, %v1954
        %v1989 = vadd.f32 %v1893, %v1956
        %v1990 = vadd.f32 %v1894, %v1958
        %v1993 = vrot.slane %v1246, 1
        %v1994 = vsel %vm1303, %v1698, %v1993
        %v1995 = vrot.slane %v1251, 1
        %v1996 = vsel %vm1303, %v1993, %v1995
        %1997 = vrot.lane.b32.xlu0 %v1314, 72
        %v1998 = vpop.permute.xlu0 %1997
        %1999 = vrot.lane.b32.xlu0 %v1316, 72
        %v2000 = vpop.permute.xlu0 %1999
        %2001 = vrot.lane.b32.xlu0 %v1318, 72
        %v2002 = vpop.permute.xlu0 %2001
        %2003 = vrot.lane.b32.xlu0 %v1320, 72
        %v2004 = vpop.permute.xlu0 %2003
        %2005 = vrot.lane.b32.xlu0 %v1322, 72
        %v2006 = vpop.permute.xlu0 %2005
        %2007 = vrot.lane.b32.xlu0 %v1324, 72
        %v2008 = vpop.permute.xlu0 %2007
        %2009 = vrot.lane.b32.xlu0 %v1326, 72
        %v2010 = vpop.permute.xlu0 %2009
        %2011 = vrot.lane.b32.xlu0 %v1328, 72
        %v2012 = vpop.permute.xlu0 %2011
        %2013 = vrot.lane.b32.xlu0 %v1330, 72
        %v2014 = vpop.permute.xlu0 %2013
        %2015 = vrot.lane.b32.xlu0 %v1332, 72
        %v2016 = vpop.permute.xlu0 %2015
        %2017 = vrot.lane.b32.xlu0 %v1334, 72
        %v2018 = vpop.permute.xlu0 %2017
        %2019 = vrot.lane.b32.xlu0 %v1336, 72
        %v2020 = vpop.permute.xlu0 %2019
        %2021 = vrot.lane.b32.xlu0 %v1697, 72
        %v2022 = vpop.permute.xlu0 %2021
        %2023 = vrot.lane.b32.xlu0 %v1699, 72
        %v2024 = vpop.permute.xlu0 %2023
        %2025 = vrot.lane.b32.xlu0 %v1994, 72
        %v2026 = vpop.permute.xlu0 %2025
        %2027 = vrot.lane.b32.xlu0 %v1996, 72
        %v2028 = vpop.permute.xlu0 %2027
        %v2045 = vadd.f32 %v1975, %v1998
        %v2046 = vadd.f32 %v1976, %v2000
        %v2047 = vadd.f32 %v1977, %v2002
        %v2048 = vadd.f32 %v1978, %v2004
        %v2049 = vadd.f32 %v1979, %v2006
        %v2050 = vadd.f32 %v1980, %v2008
        %v2051 = vadd.f32 %v1981, %v2010
        %v2052 = vadd.f32 %v1982, %v2012
        %v2053 = vadd.f32 %v1983, %v2014
        %v2054 = vadd.f32 %v1984, %v2016
        %v2055 = vadd.f32 %v1985, %v2018
        %v2056 = vadd.f32 %v1986, %v2020
        %v2057 = vadd.f32 %v1987, %v2022
        %v2058 = vadd.f32 %v1988, %v2024
        %v2059 = vadd.f32 %v1989, %v2026
        %v2060 = vadd.f32 %v1990, %v2028
        %v2061 = vmul.f32 %v1171, %v1418
        %v2062 = vmul.f32 %v1176, %v1420
        %v2063 = vmul.f32 %v1181, %v1422
        %v2064 = vmul.f32 %v1186, %v1424
        %v2065 = vmul.f32 %v1191, %v1426
        %v2066 = vmul.f32 %v1196, %v1428
        %v2067 = vmul.f32 %v1201, %v1430
        %v2068 = vmul.f32 %v1206, %v1432
        %v2069 = vmul.f32 %v1211, %v1434
        %v2070 = vmul.f32 %v1216, %v1436
        %v2071 = vmul.f32 %v1221, %v1438
        %v2072 = vmul.f32 %v1226, %v1440
        %v2073 = vmul.f32 %v1231, %v1442
        %v2074 = vmul.f32 %v1236, %v1444
        %v2075 = vmul.f32 %v1241, %v1446
        %v2076 = vmul.f32 %v1246, %v1448
        %v2077 = vmul.f32 %v1251, %v1447
        %v2095 = vrot.slane %v2061, 2
        %v2096 = vrot.slane %v2062, 2
        %v2097 = vsel %vm1500, %v2095, %v2096
        %v2098 = vrot.slane %v2063, 2
        %v2099 = vsel %vm1500, %v2096, %v2098
        %v2100 = vrot.slane %v2064, 2
        %v2101 = vsel %vm1500, %v2098, %v2100
        %v2102 = vrot.slane %v2065, 2
        %v2103 = vsel %vm1500, %v2100, %v2102
        %v2104 = vrot.slane %v2066, 2
        %v2105 = vsel %vm1500, %v2102, %v2104
        %v2106 = vrot.slane %v2067, 2
        %v2107 = vsel %vm1500, %v2104, %v2106
        %v2108 = vrot.slane %v2068, 2
        %v2109 = vsel %vm1500, %v2106, %v2108
        %v2110 = vrot.slane %v2069, 2
        %v2111 = vsel %vm1500, %v2108, %v2110
        %v2112 = vrot.slane %v2070, 2
        %v2113 = vsel %vm1500, %v2110, %v2112
        %v2114 = vrot.slane %v2071, 2
        %v2115 = vsel %vm1500, %v2112, %v2114
        %v2116 = vrot.slane %v2072, 2
        %v2117 = vsel %vm1500, %v2114, %v2116
        %v2118 = vrot.slane %v2073, 2
        %v2119 = vsel %vm1500, %v2116, %v2118
        %v2120 = vrot.slane %v2074, 2
        %v2121 = vsel %vm1500, %v2118, %v2120
        %v2122 = vrot.slane %v2075, 2
        %v2123 = vsel %vm1500, %v2120, %v2122
        %v2124 = vrot.slane %v2076, 2
        %v2125 = vsel %vm1500, %v2122, %v2124
        %v2126 = vrot.slane %v2077, 2
        %v2127 = vsel %vm1500, %v2124, %v2126
        %2128 = vrot.lane.b32.xlu0 %v2097, 64
        %v2129 = vpop.permute.xlu0 %2128
        %2130 = vrot.lane.b32.xlu0 %v2099, 64
        %v2131 = vpop.permute.xlu0 %2130
        %2132 = vrot.lane.b32.xlu0 %v2101, 64
        %v2133 = vpop.permute.xlu0 %2132
        %2134 = vrot.lane.b32.xlu0 %v2103, 64
        %v2135 = vpop.permute.xlu0 %2134
        %2136 = vrot.lane.b32.xlu0 %v2105, 64
        %v2137 = vpop.permute.xlu0 %2136
        %2138 = vrot.lane.b32.xlu0 %v2107, 64
        %v2139 = vpop.permute.xlu0 %2138
        %2140 = vrot.lane.b32.xlu0 %v2109, 64
        %v2141 = vpop.permute.xlu0 %2140
        %2142 = vrot.lane.b32.xlu0 %v2111, 64
        %v2143 = vpop.permute.xlu0 %2142
        %2144 = vrot.lane.b32.xlu0 %v2113, 64
        %v2145 = vpop.permute.xlu0 %2144
        %2146 = vrot.lane.b32.xlu0 %v2115, 64
        %v2147 = vpop.permute.xlu0 %2146
        %2148 = vrot.lane.b32.xlu0 %v2117, 64
        %v2149 = vpop.permute.xlu0 %2148
        %2150 = vrot.lane.b32.xlu0 %v2119, 64
        %v2151 = vpop.permute.xlu0 %2150
        %2152 = vrot.lane.b32.xlu0 %v2121, 64
        %v2153 = vpop.permute.xlu0 %2152
        %2154 = vrot.lane.b32.xlu0 %v2123, 64
        %v2155 = vpop.permute.xlu0 %2154
        %2156 = vrot.lane.b32.xlu0 %v2125, 64
        %v2157 = vpop.permute.xlu0 %2156
        %2158 = vrot.lane.b32.xlu0 %v2127, 64
        %v2159 = vpop.permute.xlu0 %2158
        %v2176 = vadd.f32 %v2045, %v2129
        %v2177 = vadd.f32 %v2046, %v2131
        %v2178 = vadd.f32 %v2047, %v2133
        %v2179 = vadd.f32 %v2048, %v2135
        %v2180 = vadd.f32 %v2049, %v2137
        %v2181 = vadd.f32 %v2050, %v2139
        %v2182 = vadd.f32 %v2051, %v2141
        %v2183 = vadd.f32 %v2052, %v2143
        %v2184 = vadd.f32 %v2053, %v2145
        %v2185 = vadd.f32 %v2054, %v2147
        %v2186 = vadd.f32 %v2055, %v2149
        %v2187 = vadd.f32 %v2056, %v2151
        %v2188 = vadd.f32 %v2057, %v2153
        %v2189 = vadd.f32 %v2058, %v2155
        %v2190 = vadd.f32 %v2059, %v2157
        %v2191 = vadd.f32 %v2060, %v2159
        %v2192 = vld [vmem:[%s5] sm:$0x1]
        %v2194 = vlaneseq
        %v2195 = vshrl.u32 %v2194, 7
        %v2196 = vsub.s32 0, %v2195
        %v2197 = vrot.slane %v2192, %v2196
        %v2199 = vmul.f32 %v2176, %v2197
        %v2200 = vmul.f32 %v2177, %v2197
        %v2201 = vmul.f32 %v2178, %v2197
        %v2202 = vmul.f32 %v2179, %v2197
        %v2203 = vmul.f32 %v2180, %v2197
        %v2204 = vmul.f32 %v2181, %v2197
        %v2205 = vmul.f32 %v2182, %v2197
        %v2206 = vmul.f32 %v2183, %v2197
        %v2207 = vmul.f32 %v2184, %v2197
        %v2208 = vmul.f32 %v2185, %v2197
        %v2209 = vmul.f32 %v2186, %v2197
        %v2210 = vmul.f32 %v2187, %v2197
        %v2211 = vmul.f32 %v2188, %v2197
        %v2212 = vmul.f32 %v2189, %v2197
        %v2213 = vmul.f32 %v2190, %v2197
        %v2214 = vmul.f32 %v2191, %v2197
        %v2215 = vld [vmem:[%s6] sm:$0x1]
        %v2217 = vlaneseq
        %v2218 = vshrl.u32 %v2217, 7
        %v2219 = vsub.s32 0, %v2218
        %v2220 = vrot.slane %v2215, %v2219
        %v2222 = vadd.f32 %v2199, %v2220
        %v2223 = vadd.f32 %v2200, %v2220
        %v2224 = vadd.f32 %v2201, %v2220
        %v2225 = vadd.f32 %v2202, %v2220
        %v2226 = vadd.f32 %v2203, %v2220
        %v2227 = vadd.f32 %v2204, %v2220
        %v2228 = vadd.f32 %v2205, %v2220
        %v2229 = vadd.f32 %v2206, %v2220
        %v2230 = vadd.f32 %v2207, %v2220
        %v2231 = vadd.f32 %v2208, %v2220
        %v2232 = vadd.f32 %v2209, %v2220
        %v2233 = vadd.f32 %v2210, %v2220
        %v2234 = vadd.f32 %v2211, %v2220
        %v2235 = vadd.f32 %v2212, %v2220
        %v2236 = vadd.f32 %v2213, %v2220
        %v2237 = vadd.f32 %v2214, %v2220
        %v2238 = vxor.u32 %v2222, 2147483648
        %v2239 = vxor.u32 %v2223, 2147483648
        %v2240 = vxor.u32 %v2224, 2147483648
        %v2241 = vxor.u32 %v2225, 2147483648
        %v2242 = vxor.u32 %v2226, 2147483648
        %v2243 = vxor.u32 %v2227, 2147483648
        %v2244 = vxor.u32 %v2228, 2147483648
        %v2245 = vxor.u32 %v2229, 2147483648
        %v2246 = vxor.u32 %v2230, 2147483648
        %v2247 = vxor.u32 %v2231, 2147483648
        %v2248 = vxor.u32 %v2232, 2147483648
        %v2249 = vxor.u32 %v2233, 2147483648
        %v2250 = vxor.u32 %v2234, 2147483648
        %v2251 = vxor.u32 %v2235, 2147483648
        %v2252 = vxor.u32 %v2236, 2147483648
        %v2253 = vxor.u32 %v2237, 2147483648
        %v2254 = vmul.f32 %v2238, 1.442695
        %v2255 = vpow.pop %v2254
        %v2256 = vmul.f32 %v2239, 1.442695
        %v2257 = vpow.pop %v2256
        %v2258 = vmul.f32 %v2240, 1.442695
        %v2259 = vpow.pop %v2258
        %v2260 = vmul.f32 %v2241, 1.442695
        %v2261 = vpow.pop %v2260
        %v2262 = vmul.f32 %v2242, 1.442695
        %v2263 = vpow.pop %v2262
        %v2264 = vmul.f32 %v2243, 1.442695
        %v2265 = vpow.pop %v2264
        %v2266 = vmul.f32 %v2244, 1.442695
        %v2267 = vpow.pop %v2266
        %v2268 = vmul.f32 %v2245, 1.442695
        %v2269 = vpow.pop %v2268
        %v2270 = vmul.f32 %v2246, 1.442695
        %v2271 = vpow.pop %v2270
        %v2272 = vmul.f32 %v2247, 1.442695
        %v2273 = vpow.pop %v2272
        %v2274 = vmul.f32 %v2248, 1.442695
        %v2275 = vpow.pop %v2274
        %v2276 = vmul.f32 %v2249, 1.442695
        %v2277 = vpow.pop %v2276
        %v2278 = vmul.f32 %v2250, 1.442695
        %v2279 = vpow.pop %v2278
        %v2280 = vmul.f32 %v2251, 1.442695
        %v2281 = vpow.pop %v2280
        %v2282 = vmul.f32 %v2252, 1.442695
        %v2283 = vpow.pop %v2282
        %v2284 = vmul.f32 %v2253, 1.442695
        %v2285 = vpow.pop %v2284
        %v2286 = vadd.f32 %v2255, 1.0
        %v2287 = vadd.f32 %v2257, 1.0
        %v2288 = vadd.f32 %v2259, 1.0
        %v2289 = vadd.f32 %v2261, 1.0
        %v2290 = vadd.f32 %v2263, 1.0
        %v2291 = vadd.f32 %v2265, 1.0
        %v2292 = vadd.f32 %v2267, 1.0
        %v2293 = vadd.f32 %v2269, 1.0
        %v2294 = vadd.f32 %v2271, 1.0
        %v2295 = vadd.f32 %v2273, 1.0
        %v2296 = vadd.f32 %v2275, 1.0
        %v2297 = vadd.f32 %v2277, 1.0
        %v2298 = vadd.f32 %v2279, 1.0
        %v2299 = vadd.f32 %v2281, 1.0
        %v2300 = vadd.f32 %v2283, 1.0
        %v2301 = vadd.f32 %v2285, 1.0
        %v2302 = vrcp.pop %v2286
        %v2303 = vmul.f32 1.0, %v2302
        %v2304 = vrcp.pop %v2287
        %v2305 = vmul.f32 1.0, %v2304
        %v2306 = vrcp.pop %v2288
        %v2307 = vmul.f32 1.0, %v2306
        %v2308 = vrcp.pop %v2289
        %v2309 = vmul.f32 1.0, %v2308
        %v2310 = vrcp.pop %v2290
        %v2311 = vmul.f32 1.0, %v2310
        %v2312 = vrcp.pop %v2291
        %v2313 = vmul.f32 1.0, %v2312
        %v2314 = vrcp.pop %v2292
        %v2315 = vmul.f32 1.0, %v2314
        %v2316 = vrcp.pop %v2293
        %v2317 = vmul.f32 1.0, %v2316
        %v2318 = vrcp.pop %v2294
        %v2319 = vmul.f32 1.0, %v2318
        %v2320 = vrcp.pop %v2295
        %v2321 = vmul.f32 1.0, %v2320
        %v2322 = vrcp.pop %v2296
        %v2323 = vmul.f32 1.0, %v2322
        %v2324 = vrcp.pop %v2297
        %v2325 = vmul.f32 1.0, %v2324
        %v2326 = vrcp.pop %v2298
        %v2327 = vmul.f32 1.0, %v2326
        %v2328 = vrcp.pop %v2299
        %v2329 = vmul.f32 1.0, %v2328
        %v2330 = vrcp.pop %v2300
        %v2331 = vmul.f32 1.0, %v2330
        %v2332 = vrcp.pop %v2301
        %v2333 = vmul.f32 1.0, %v2332
        %v2334 = vmul.f32 %v2222, %v2303
        %v2335 = vmul.f32 %v2223, %v2305
        %v2336 = vmul.f32 %v2224, %v2307
        %v2337 = vmul.f32 %v2225, %v2309
        %v2338 = vmul.f32 %v2226, %v2311
        %v2339 = vmul.f32 %v2227, %v2313
        %v2340 = vmul.f32 %v2228, %v2315
        %v2341 = vmul.f32 %v2229, %v2317
        %v2342 = vmul.f32 %v2230, %v2319
        %v2343 = vmul.f32 %v2231, %v2321
        %v2344 = vmul.f32 %v2232, %v2323
        %v2345 = vmul.f32 %v2233, %v2325
        %v2346 = vmul.f32 %v2234, %v2327
        %v2347 = vmul.f32 %v2235, %v2329
        %v2348 = vmul.f32 %v2236, %v2331
        %v2349 = vmul.f32 %v2237, %v2333
        %s2350 = scalar_lea.vmem %s273, %s992
        %v2351 = vld [vmem:[%s2350] sm:$0xff]
        %v2352 = vld [vmem:[%s2350 + $0x8] sm:$0xff]
        %v2353 = vld [vmem:[%s2350 + $0x10] sm:$0xff]
        %v2354 = vld [vmem:[%s2350 + $0x18] sm:$0xff]
        %v2355 = vld [vmem:[%s2350 + $0x20] sm:$0xff]
        %v2356 = vld [vmem:[%s2350 + $0x28] sm:$0xff]
        %v2357 = vld [vmem:[%s2350 + $0x30] sm:$0xff]
        %v2358 = vld [vmem:[%s2350 + $0x38] sm:$0xff]
        %v2359 = vld [vmem:[%s2350 + $0x40] sm:$0xff]
        %v2360 = vld [vmem:[%s2350 + $0x48] sm:$0xff]
        %v2361 = vld [vmem:[%s2350 + $0x50] sm:$0xff]
        %v2362 = vld [vmem:[%s2350 + $0x58] sm:$0xff]
        %v2363 = vld [vmem:[%s2350 + $0x60] sm:$0xff]
        %v2364 = vld [vmem:[%s2350 + $0x68] sm:$0xff]
        %v2365 = vld [vmem:[%s2350 + $0x70] sm:$0xff]
        %v2366 = vld [vmem:[%s2350 + $0x78] sm:$0xff]
        %v2367 = vadd.f32 %v2334, %v2351
        %v2368 = vadd.f32 %v2335, %v2352
        %v2369 = vadd.f32 %v2336, %v2353
        %v2370 = vadd.f32 %v2337, %v2354
        %v2371 = vadd.f32 %v2338, %v2355
        %v2372 = vadd.f32 %v2339, %v2356
        %v2373 = vadd.f32 %v2340, %v2357
        %v2374 = vadd.f32 %v2341, %v2358
        %v2375 = vadd.f32 %v2342, %v2359
        %v2376 = vadd.f32 %v2343, %v2360
        %v2377 = vadd.f32 %v2344, %v2361
        %v2378 = vadd.f32 %v2345, %v2362
        %v2379 = vadd.f32 %v2346, %v2363
        %v2380 = vadd.f32 %v2347, %v2364
        %v2381 = vadd.f32 %v2348, %v2365
        %v2382 = vadd.f32 %v2349, %v2366
        %s2383 = scalar_lea.vmem %s278, %s992
        %vm2384 = vcmask 64512
        %2385 = vst.msk [vmem:[%s2383] sm:$0xff] %vm2384, %v2367
        %2386 = vst.msk [vmem:[%s2383 + $0x8] sm:$0xff] %vm2384, %v2368
        %2387 = vst.msk [vmem:[%s2383 + $0x10] sm:$0xff] %vm2384, %v2369
        %2388 = vst.msk [vmem:[%s2383 + $0x18] sm:$0xff] %vm2384, %v2370
        %2389 = vst.msk [vmem:[%s2383 + $0x20] sm:$0xff] %vm2384, %v2371
        %2390 = vst.msk [vmem:[%s2383 + $0x28] sm:$0xff] %vm2384, %v2372
        %2391 = vst.msk [vmem:[%s2383 + $0x30] sm:$0xff] %vm2384, %v2373
        %2392 = vst.msk [vmem:[%s2383 + $0x38] sm:$0xff] %vm2384, %v2374
        %2393 = vst.msk [vmem:[%s2383 + $0x40] sm:$0xff] %vm2384, %v2375
        %2394 = vst.msk [vmem:[%s2383 + $0x48] sm:$0xff] %vm2384, %v2376
        %2395 = vst.msk [vmem:[%s2383 + $0x50] sm:$0xff] %vm2384, %v2377
        %2396 = vst.msk [vmem:[%s2383 + $0x58] sm:$0xff] %vm2384, %v2378
        %2397 = vst.msk [vmem:[%s2383 + $0x60] sm:$0xff] %vm2384, %v2379
        %2398 = vst.msk [vmem:[%s2383 + $0x68] sm:$0xff] %vm2384, %v2380
        %2399 = vst.msk [vmem:[%s2383 + $0x70] sm:$0xff] %vm2384, %v2381
        %2400 = vst.msk [vmem:[%s2383 + $0x78] sm:$0xff] %vm2384, %v2382
      $region60: #{bottleneck.1} parent=47 // loop_footer
        %s991 = sadd.s32 1, %s987
      $region61: #{bottleneck.1} parent=47 // loop_footer_branch
        %986 = sbr.rel target = $region57
      $region62: #{bottleneck.1} parent=47 // loop_exit
        _
      %p2401 = scmp.lt.s32.totalorder %s18, 1
      %s2402 = scalar_select %p2401, %s18, 1
      %s2403 = smul.addr %s2402, 32
      %s2404 = smul.addr %s2403, 8
      %s2405 = scalar_lea.vmem %s7, %s2404
      // Predicated region
      $region63: #{bottleneck.1} parent=47 // pred_check
        %p2406 = pneg %p188
      $region64: #{bottleneck.1} parent=47 // pred_check_branch
        %2408 = sbr.rel (%p2406) target = $region66
      $region65: #{bottleneck.1} parent=47 // pred_region
        _
      $region66: #{bottleneck.1} parent=47 // pred_fallthru
        _
    $region48: #{bottleneck.1} parent=5 // pred_fallthru
      _
    %p2409 = scmp.le.s32.totalorder 2, %s13
    // Predicated region
    $region67: #{bottleneck.1} parent=5 // pred_check
      %p2410 = pneg %p2409
    $region68: #{bottleneck.1} parent=5 // pred_check_branch
      %2412 = sbr.rel (%p2410) target = $region70
    $region69: #{bottleneck.1} parent=5 // pred_region
      %s2413 = ssub.s32 %s13, 2
      // Predicated region
      $region71: #{bottleneck.1} parent=69 // pred_check
        %p2414 = pneg %p194
      $region72: #{bottleneck.1} parent=69 // pred_check_branch
        %2416 = sbr.rel (%p2414) target = $region74
      $region73: #{bottleneck.1} parent=69 // pred_region
        %p2417 = scmp.lt.s32.totalorder %s19, 1
        %s2418 = scalar_select %p2417, %s19, 1
        %s2419 = smul.addr %s2418, 32
        %s2420 = smul.addr %s2419, 8
        %s2421 = scalar_lea.vmem %s7, %s2420
      $region74: #{bottleneck.1} parent=69 // pred_fallthru
        _
    $region70: #{bottleneck.1} parent=5 // pred_fallthru
      _
  $region6: #{bottleneck.1} parent=0 // loop_footer
    %s17 = sadd.s32 1, %s13
  $region7: #{bottleneck.1} parent=0 // loop_footer_branch
    %12 = sbr.rel target = $region3
  $region8: #{bottleneck.1} parent=0 // loop_exit
    _

</llo_original>
